<compile_context>
chip_gen: v6e
topology: v6e:2x2x1
jax: 0.10.0
libtpu: 0.0.40
codegen_flags: <defaults>
</compile_context>

<pallas_src>
import functools

import jax
import jax.numpy as jnp
from jax.experimental import pallas as pl
from jax.experimental.pallas import tpu as pltpu


# ----------------------------------------------------------------------------
# Kernel 1: 3x3 conv, stride 1, pad 1  — one im2col matmul on the MXU
# ----------------------------------------------------------------------------
def _conv3x3_kernel(xp_ref, w_ref, b_ref, o_ref, *, H, W, C):
    # xp_ref: (1, H+2, W+2, C)   zero-padded input tile (bf16)
    # w_ref : (9*C, C)           tap-major weights, row block t*C..(t+1)*C = tap t (bf16)
    # b_ref : (1, C)             bias (f32)
    # o_ref : (1, H*W, C)        conv output, flattened spatial (bf16)
    #
    # Build the 3 dw-shifted slabs once (only misaligned sublane slices here);
    # the dh shifts below are leading-dim slices, which are cheap.
    dw_slabs = [xp_ref[0, :, dw:dw + W, :] for dw in range(3)]     # each (H+2, W, C)

    cols = []
    for dh in range(3):
        for dw in range(3):                                        # tap t = dh*3 + dw
            cols.append(dw_slabs[dw][dh:dh + H].reshape(H * W, C))
    patches = jnp.concatenate(cols, axis=-1)                       # (H*W, 9*C), lane-aligned

    acc = jnp.dot(patches, w_ref[...], preferred_element_type=jnp.float32)
    acc = acc + b_ref[...]                                         # bias in f32
    o_ref[...] = acc.astype(o_ref.dtype).reshape(1, H * W, C)


def conv3x3(x_nhwc, w9, b):
    # TODO(synk): for production FPN sizes, tile H with a 1-row halo in the index_map
    #             (and fold the zero pad into the halo) instead of whole-image blocks.
    N, H, W, C = x_nhwc.shape
    feat_dtype = w9.dtype
    xp = jnp.pad(x_nhwc.astype(feat_dtype), ((0, 0), (1, 1), (1, 1), (0, 0)))
    kern = functools.partial(_conv3x3_kernel, H=H, W=W, C=C)
    return pl.pallas_call(
        kern,
        out_shape=jax.ShapeDtypeStruct((N, H * W, C), feat_dtype),
        grid=(N,),
        in_specs=[
            pl.BlockSpec((1, H + 2, W + 2, C), lambda n: (n, 0, 0, 0)),
            pl.BlockSpec((9 * C, C), lambda n: (0, 0)),
            pl.BlockSpec((1, C), lambda n: (0, 0)),
        ],
        out_specs=pl.BlockSpec((1, H * W, C), lambda n: (n, 0, 0)),
        compiler_params=pltpu.CompilerParams(dimension_semantics=("parallel",)),
    )(xp, w9, b)


# ----------------------------------------------------------------------------
# Kernel 2: fused  MaxPool3d((D,3,3), pad(1,1,1))[depth slice]  +  residual add
#           +  GroupNorm(32)  +  ReLU
#
# MaxPool3d semantics: the depth slice min(l, margin) taken afterwards always has a
# depth window covering every valid depth slice (D <= 3), so the exact result equals
# "max over ALL depth slices and the 3x3 spatial window" (with -inf spatial padding).
# ----------------------------------------------------------------------------
def _maxnorm_kernel(f_ref, x_ref, g_ref, b_ref, gm_ref, o_ref, *, D, H, W, C):
    # f_ref : (1, D, H+2, W+2, C)  stacked features, spatially padded with dtype-min (bf16)
    # x_ref : (1, H*W, C)          original (pre-conv) input of this level (f32)
    # g_ref / b_ref : (1, C)       GroupNorm gamma / beta (f32)
    # gm_ref: (C, C)               group-membership matrix pre-scaled by 1/(H*W*gs) (f32)
    # o_ref : (1, H*W, C)          output (f32)

    # Separable 3D max: depth (aligned) -> 1x3 over dw -> 3x1 over dh.
    m = f_ref[0, 0]
    for d in range(1, D):
        m = jnp.maximum(m, f_ref[0, d])                            # (H+2, W+2, C)
    mw = jnp.maximum(jnp.maximum(m[:, 0:W, :], m[:, 1:W + 1, :]), m[:, 2:W + 2, :])
    mh = jnp.maximum(jnp.maximum(mw[0:H], mw[1:H + 1]), mw[2:H + 2])   # (H, W, C)

    out = mh.astype(jnp.float32).reshape(H * W, C) + x_ref[0]      # residual add, f32

    # GroupNorm: per-channel sums -> group means via one (2,C)x(C,C) MXU dot.
    s1 = jnp.sum(out, axis=0, keepdims=True)                       # (1, C)
    s2 = jnp.sum(out * out, axis=0, keepdims=True)                 # (1, C)
    stats = jnp.dot(jnp.concatenate([s1, s2], axis=0), gm_ref[...],
                    preferred_element_type=jnp.float32)            # (2, C); 1/cnt folded in
    mean = stats[0:1, :]
    var = stats[1:2, :] - mean * mean
    inv = jax.lax.rsqrt(var + 1e-5)
    y = (out - mean) * inv * g_ref[...] + b_ref[...]
    o_ref[...] = jnp.maximum(y, 0.0).reshape(1, H * W, C)


def maxpool_groupnorm_relu(feat3d_nhwc, x_flat, gamma, beta, gmat, group_size):
    # TODO(synk): for production FPN sizes (v7x 64 MiB VMEM) tile H with a 1-row halo
    #             and a 2-pass / scratch-accumulator GroupNorm across H tiles; also
    #             replace the -inf jnp.pad round-trip with in-kernel border masks.
    N, D, H, W, C = feat3d_nhwc.shape
    neg = float(jnp.finfo(feat3d_nhwc.dtype).min)
    fp = jnp.pad(feat3d_nhwc, ((0, 0), (0, 0), (1, 1), (1, 1), (0, 0)),
                 constant_values=neg)
    gm = gmat * (1.0 / float(H * W * group_size))                  # fold 1/cnt into gmat
    kern = functools.partial(_maxnorm_kernel, D=D, H=H, W=W, C=C)
    return pl.pallas_call(
        kern,
        out_shape=jax.ShapeDtypeStruct((N, H * W, C), jnp.float32),
        grid=(N,),
        in_specs=[
            pl.BlockSpec((1, D, H + 2, W + 2, C), lambda n: (n, 0, 0, 0, 0)),
            pl.BlockSpec((1, H * W, C), lambda n: (n, 0, 0)),
            pl.BlockSpec((1, C), lambda n: (0, 0)),
            pl.BlockSpec((1, C), lambda n: (0, 0)),
            pl.BlockSpec((C, C), lambda n: (0, 0)),
        ],
        out_specs=pl.BlockSpec((1, H * W, C), lambda n: (n, 0, 0)),
        compiler_params=pltpu.CompilerParams(dimension_semantics=("parallel",)),
    )(fp, x_flat, gamma, beta, gm)


# ----------------------------------------------------------------------------
# Full MaxFiltering forward
# ----------------------------------------------------------------------------
def max_filtering_forward(inputs_nchw, params):
    margin = params["margin"]
    feat_dtype = params["w9"].dtype

    inputs_nhwc = [jnp.transpose(x, (0, 2, 3, 1)) for x in inputs_nchw]  # NCHW -> NHWC
    shapes = [x.shape for x in inputs_nhwc]

    # conv over every pyramid level (bf16 inter-level storage)
    feats = [conv3x3(x, params["w9"], params["b"]).reshape(s)
             for x, s in zip(inputs_nhwc, shapes)]                       # (N, H, W, C)
    L = len(feats)

    outputs = []
    for l in range(L):
        N, H, W, C = shapes[l]
        slabs = []
        for k in range(max(0, l - margin), min(L, l + margin + 1)):
            if k == l:
                slabs.append(feats[k])
            else:
                # bilinear resize, align_corners=False (glue: jax.image.resize, f32 math)
                r = jax.image.resize(feats[k].astype(jnp.float32),
                                     (N, H, W, C), method="bilinear", antialias=False)
                slabs.append(r.astype(feat_dtype))
        feat3d = jnp.stack(slabs, axis=1)                                # (N, D, H, W, C)

        x_flat = inputs_nhwc[l].reshape(N, H * W, C)
        y = maxpool_groupnorm_relu(feat3d, x_flat, params["gamma"], params["beta"],
                                   params["gmat"], params["group_size"])
        y = y.reshape(N, H, W, C)
        outputs.append(jnp.transpose(y, (0, 3, 1, 2)))                   # back to NCHW
    return outputs


def init_params(key, in_channels, tau=2, num_groups=32, feat_dtype=jnp.bfloat16):
    assert in_channels % num_groups == 0
    gs = in_channels // num_groups
    kw, kb = jax.random.split(key)
    # Conv2d weight in PyTorch layout (Cout, Cin, 3, 3), deterministic init.
    w = jax.random.normal(kw, (in_channels, in_channels, 3, 3), jnp.float32) * 0.05
    b = jax.random.normal(kb, (in_channels,), jnp.float32) * 0.05
    # tap-major im2col weights: row block t*C + ci, column co  (t = dh*3 + dw)
    w9 = jnp.transpose(w, (2, 3, 1, 0)).reshape(9 * in_channels, in_channels)
    w9 = w9.astype(feat_dtype)
    # GroupNorm affine params (PyTorch defaults: gamma=1, beta=0)
    gamma = jnp.ones((1, in_channels), jnp.float32)
    beta = jnp.zeros((1, in_channels), jnp.float32)
    # group-membership matrix: M[i, j] = 1 iff channels i, j share a group
    gid = jnp.arange(in_channels) // gs
    gmat = (gid[:, None] == gid[None, :]).astype(jnp.float32)
    return dict(w9=w9, b=b.reshape(1, in_channels), gamma=gamma, beta=beta,
                gmat=gmat, group_size=gs, margin=tau // 2)


if __name__ == "__main__":
    key = jax.random.PRNGKey(0)
    kp, k0, k1, k2 = jax.random.split(key, 4)

    # C=128 keeps the lane axis dense (GroupNorm(32, C) requires C % 32 == 0).
    N, C = 2, 128
    params = init_params(kp, C, tau=2)

    # FPN-style pyramid of 3 levels (NCHW, like the PyTorch module)
    inputs = [
        jax.random.normal(k0, (N, C, 16, 16), jnp.float32),
        jax.random.normal(k1, (N, C, 8, 8), jnp.float32),
        jax.random.normal(k2, (N, C, 4, 4), jnp.float32),
    ]

    outs = max_filtering_forward(inputs, params)
    for o in outs:
        jax.block_until_ready(o)
    assert [tuple(o.shape) for o in outs] == [tuple(x.shape) for x in inputs]
    print("KERNEL_OK")
</pallas_src>

<mosaic_0001>
module attributes {stable_mosaic.version = 11 : i64} {
  func.func @_conv3x3_kernel(%arg0: i32, %arg1: memref<1x18x18x128xbf16, #tpu.memory_space<vmem>>, %arg2: memref<1152x128xbf16, #tpu.memory_space<vmem>>, %arg3: memref<1x128xf32, #tpu.memory_space<vmem>>, %arg4: memref<1x256x128xbf16, #tpu.memory_space<vmem>>) attributes {dimension_semantics = [#tpu.dimension_semantics<parallel>], iteration_bounds = array<i64: 2>, scalar_prefetch = 0 : i64, scratch_operands = 0 : i64, tpu.core_type = #tpu.core_type<tc>, window_params = [{transform_indices = @transform_0, window_bounds = array<i64: 1, 18, 18, 128>}, {pipeline_mode = #tpu.pipeline_mode<synchronous>, transform_indices = @transform_1, window_bounds = array<i64: 1152, 128>}, {pipeline_mode = #tpu.pipeline_mode<synchronous>, transform_indices = @transform_2, window_bounds = array<i64: 1, 128>}, {transform_indices = @transform_3, window_bounds = array<i64: 1, 256, 128>}]} {
    %c0 = arith.constant 0 : index
    %c0_0 = arith.constant 0 : index
    %c0_1 = arith.constant 0 : index
    %c0_2 = arith.constant 0 : index
    %0 = vector.load %arg1[%c0, %c0_0, %c0_1, %c0_2] : memref<1x18x18x128xbf16, #tpu.memory_space<vmem>>, vector<1x18x16x128xbf16>
    %1 = vector.shape_cast %0 : vector<1x18x16x128xbf16> to vector<18x16x128xbf16>
    %c0_3 = arith.constant 0 : index
    %c0_4 = arith.constant 0 : index
    %c1 = arith.constant 1 : index
    %c0_5 = arith.constant 0 : index
    %2 = vector.load %arg1[%c0_3, %c0_4, %c1, %c0_5] : memref<1x18x18x128xbf16, #tpu.memory_space<vmem>>, vector<1x18x16x128xbf16>
    %3 = vector.shape_cast %2 : vector<1x18x16x128xbf16> to vector<18x16x128xbf16>
    %c0_6 = arith.constant 0 : index
    %c0_7 = arith.constant 0 : index
    %c2 = arith.constant 2 : index
    %c0_8 = arith.constant 0 : index
    %4 = vector.load %arg1[%c0_6, %c0_7, %c2, %c0_8] : memref<1x18x18x128xbf16, #tpu.memory_space<vmem>>, vector<1x18x16x128xbf16>
    %5 = vector.shape_cast %4 : vector<1x18x16x128xbf16> to vector<18x16x128xbf16>
    %6 = vector.extract_strided_slice %1 {offsets = [0, 0, 0], sizes = [16, 16, 128], strides = [1, 1, 1]} : vector<18x16x128xbf16> to vector<16x16x128xbf16>
    %7 = vector.shape_cast %6 : vector<16x16x128xbf16> to vector<256x128xbf16>
    %8 = vector.extract_strided_slice %3 {offsets = [0, 0, 0], sizes = [16, 16, 128], strides = [1, 1, 1]} : vector<18x16x128xbf16> to vector<16x16x128xbf16>
    %9 = vector.shape_cast %8 : vector<16x16x128xbf16> to vector<256x128xbf16>
    %10 = vector.extract_strided_slice %5 {offsets = [0, 0, 0], sizes = [16, 16, 128], strides = [1, 1, 1]} : vector<18x16x128xbf16> to vector<16x16x128xbf16>
    %11 = vector.shape_cast %10 : vector<16x16x128xbf16> to vector<256x128xbf16>
    %12 = vector.extract_strided_slice %1 {offsets = [1, 0, 0], sizes = [16, 16, 128], strides = [1, 1, 1]} : vector<18x16x128xbf16> to vector<16x16x128xbf16>
    %13 = vector.shape_cast %12 : vector<16x16x128xbf16> to vector<256x128xbf16>
    %14 = vector.extract_strided_slice %3 {offsets = [1, 0, 0], sizes = [16, 16, 128], strides = [1, 1, 1]} : vector<18x16x128xbf16> to vector<16x16x128xbf16>
    %15 = vector.shape_cast %14 : vector<16x16x128xbf16> to vector<256x128xbf16>
    %16 = vector.extract_strided_slice %5 {offsets = [1, 0, 0], sizes = [16, 16, 128], strides = [1, 1, 1]} : vector<18x16x128xbf16> to vector<16x16x128xbf16>
    %17 = vector.shape_cast %16 : vector<16x16x128xbf16> to vector<256x128xbf16>
    %18 = vector.extract_strided_slice %1 {offsets = [2, 0, 0], sizes = [16, 16, 128], strides = [1, 1, 1]} : vector<18x16x128xbf16> to vector<16x16x128xbf16>
    %19 = vector.shape_cast %18 : vector<16x16x128xbf16> to vector<256x128xbf16>
    %20 = vector.extract_strided_slice %3 {offsets = [2, 0, 0], sizes = [16, 16, 128], strides = [1, 1, 1]} : vector<18x16x128xbf16> to vector<16x16x128xbf16>
    %21 = vector.shape_cast %20 : vector<16x16x128xbf16> to vector<256x128xbf16>
    %22 = vector.extract_strided_slice %5 {offsets = [2, 0, 0], sizes = [16, 16, 128], strides = [1, 1, 1]} : vector<18x16x128xbf16> to vector<16x16x128xbf16>
    %23 = vector.shape_cast %22 : vector<16x16x128xbf16> to vector<256x128xbf16>
    %24 = tpu.concatenate %7, %9, %11, %13, %15, %17, %19, %21, %23 in 1 : vector<256x128xbf16>, vector<256x128xbf16>, vector<256x128xbf16>, vector<256x128xbf16>, vector<256x128xbf16>, vector<256x128xbf16>, vector<256x128xbf16>, vector<256x128xbf16>, vector<256x128xbf16> -> vector<256x1152xbf16>
    %c0_9 = arith.constant 0 : index
    %c0_10 = arith.constant 0 : index
    %25 = vector.load %arg2[%c0_9, %c0_10] : memref<1152x128xbf16, #tpu.memory_space<vmem>>, vector<1152x128xbf16>
    %cst = arith.constant dense<0.000000e+00> : vector<256x128xf32>
    %26 = tpu.matmul %24, %25, %cst {dimension_numbers = #tpu.dot_dimension_numbers<[1], [0], [0], [1], [0, 0, 1, 1], [], []>} : vector<256x1152xbf16>, vector<1152x128xbf16>, vector<256x128xf32> -> vector<256x128xf32>
    %c0_11 = arith.constant 0 : index
    %c0_12 = arith.constant 0 : index
    %27 = vector.load %arg3[%c0_11, %c0_12] : memref<1x128xf32, #tpu.memory_space<vmem>>, vector<1x128xf32>
    %28 = vector.broadcast %27 : vector<1x128xf32> to vector<256x128xf32>
    %29 = arith.addf %26, %28 : vector<256x128xf32>
    %30 = arith.truncf %29 : vector<256x128xf32> to vector<256x128xbf16>
    %31 = vector.shape_cast %30 : vector<256x128xbf16> to vector<1x256x128xbf16>
    %c0_13 = arith.constant 0 : index
    %c0_14 = arith.constant 0 : index
    %c0_15 = arith.constant 0 : index
    %32 = vector.load %arg4[%c0_13, %c0_14, %c0_15] : memref<1x256x128xbf16, #tpu.memory_space<vmem>>, vector<1x256x128xbf16>
    tpu.vector_store %arg4[%c0_13, %c0_14, %c0_15], %31 {strides = array<i32>} : memref<1x256x128xbf16, #tpu.memory_space<vmem>>, vector<1x256x128xbf16>,
    return
  }
  func.func @transform_0(%arg0: i32) -> (i32, i32, i32, i32) {
    %c0_i32 = arith.constant 0 : i32
    %c0_i32_0 = arith.constant 0 : i32
    %c0_i32_1 = arith.constant 0 : i32
    %c0_i32_2 = arith.constant 0 : i32
    return %arg0, %c0_i32, %c0_i32_0, %c0_i32_1 : i32, i32, i32, i32
  }
  func.func @transform_1(%arg0: i32) -> (i32, i32) {
    %c0_i32 = arith.constant 0 : i32
    %c0_i32_0 = arith.constant 0 : i32
    %c0_i32_1 = arith.constant 0 : i32
    return %c0_i32, %c0_i32_0 : i32, i32
  }
  func.func @transform_2(%arg0: i32) -> (i32, i32) {
    %c0_i32 = arith.constant 0 : i32
    %c0_i32_0 = arith.constant 0 : i32
    %c0_i32_1 = arith.constant 0 : i32
    return %c0_i32, %c0_i32_0 : i32, i32
  }
  func.func @transform_3(%arg0: i32) -> (i32, i32, i32) {
    %c0_i32 = arith.constant 0 : i32
    %c0_i32_0 = arith.constant 0 : i32
    %c0_i32_1 = arith.constant 0 : i32
    return %arg0, %c0_i32, %c0_i32_0 : i32, i32, i32
  }
}

</mosaic_0001>

<llo_original>
// kernel: tpu_custom_call.1
$region0: #{tpu_custom_call.1}
  #allocation0 [shape = 'u32[]', space=smem, size = 0x4, offset = 0x4, fixed_abs, tag = 'smem constant byte address 0x4 - core index']
  #allocation1 [shape = 'u32[144,128]{1,0:T(1,128)}', space=vmem, size = 0x12000, scoped, tag = 'internal scratch']
  %s0 = inlined_call_operand.vmem [shape: bf16[2,18,18,128], index: 0, kind: input, shape index: {}]
  %s1 = inlined_call_operand.vmem [shape: bf16[1152,128], index: 1, kind: input, shape index: {}]
  %s2 = inlined_call_operand.vmem [shape: f32[1,128], index: 2, kind: input, shape index: {}]
  %s3 = inlined_call_operand.hbm [shape: bf16[2,256,128], index: 3, kind: output, shape index: {}]
  %s4 = sld [smem:[#allocation0]]
  $region45: #{tpu_custom_call.1} parent=0
    _
  %s6 = ssub.s32 1, %s4
  %s7 = scalar_select 0, %s6, %s4
  $region1: #{tpu_custom_call.1} parent=0
    #allocation2 [shape = 'u8[131072]{0}', space=vmem, size = 0x20000, scoped, tag = 'output window, operand 0']
    #allocation3 [shape = 's32[2]{0}', space=sflag, size = 0x8, scoped, tag = 'scoped memory for tpu_custom_call.1']
    %8 = vsyncpa [#allocation3], 0
    %s9 = scalar_lea.sflag [#allocation3], 1
    %10 = vsyncpa %s9, 0
    loop: start=0, step=1, limit=4
    $region2: #{tpu_custom_call.1} parent=1 // loop_pre_header
      _
    $region3: #{tpu_custom_call.1} parent=1 // loop_header
      %s12 = sphi 0, %s16
      %p13 = scmp.ge.s32.totalorder %s12, 4
      %s22 = sphi 0, %s24
      %s25 = sphi 0, %s22
      %s26 = sphi 0, %s25
      %s42 = sphi 0, %s26
      %s46 = sphi 0, %s46
      %s48 = sphi 0, %s46
      %s49 = sphi 0, %s48
      %s63 = sphi 0, %s49
      %s67 = sphi 0, %s67
      %s69 = sphi 0, %s67
      %s70 = sphi 0, %s69
      %s84 = sphi 0, %s70
      %s90 = sphi 0, %s92
      %s93 = sphi 0, %s90
      %s94 = sphi 0, %s93
      %s110 = sphi 0, %s94
    $region4: #{tpu_custom_call.1} parent=1 // loop_header_branch
      %15 = sbr.rel (%p13) target = $region8
    $region5: #{tpu_custom_call.1} parent=1 // loop_body
      %s17 = ssub.s32 %s12, 1
      %s18 = ssub.s32 %s12, 2
      %s19 = sadd.s32 %s12, 1
      %s20 = ssub.s32 %s12, %s19
      %p21 = scmp.eq.s32.totalorder %s20, 0
      %s23 = sadd.s32 %s22, 1
      %s24 = scalar_select %p21, %s22, %s23
      %p27 = pneg %p21
      %p28 = scmp.eq.s32.totalorder %s12, 1
      %p29 = por %p27, %p28
      %p30 = scmp.ne.s32.totalorder %s22, %s25
      %p31 = scmp.eq.s32.totalorder %s12, 0
      %p32 = por %p30, %p31
      %p33 = scmp.ne.s32.totalorder %s22, %s25
      %p34 = scmp.eq.s32.totalorder %s17, 1
      %p35 = por %p33, %p34
      %p36 = scmp.ne.s32.totalorder %s25, %s26
      %p37 = scmp.eq.s32.totalorder %s17, 0
      %p38 = por %p36, %p37
      %p39 = scmp.ne.s32.totalorder %s25, %s26
      %p40 = scmp.eq.s32.totalorder %s18, 1
      %p41 = por %p39, %p40
      %p43 = scmp.ne.s32.totalorder %s26, %s42
      %p44 = scmp.eq.s32.totalorder %s18, 0
      %p45 = por %p43, %p44
      %s47 = sadd.s32 %s46, 1
      %p50 = scmp.eq.s32.totalorder %s12, 1
      %p51 = scmp.ne.s32.totalorder %s46, %s48
      %p52 = scmp.eq.s32.totalorder %s12, 0
      %p53 = por %p51, %p52
      %p54 = scmp.ne.s32.totalorder %s46, %s48
      %p55 = scmp.eq.s32.totalorder %s17, 1
      %p56 = por %p54, %p55
      %p57 = scmp.ne.s32.totalorder %s48, %s49
      %p58 = scmp.eq.s32.totalorder %s17, 0
      %p59 = por %p57, %p58
      %p60 = scmp.ne.s32.totalorder %s48, %s49
      %p61 = scmp.eq.s32.totalorder %s18, 1
      %p62 = por %p60, %p61
      %p64 = scmp.ne.s32.totalorder %s49, %s63
      %p65 = scmp.eq.s32.totalorder %s18, 0
      %p66 = por %p64, %p65
      %s68 = sadd.s32 %s67, 1
      %p71 = scmp.eq.s32.totalorder %s12, 1
      %p72 = scmp.ne.s32.totalorder %s67, %s69
      %p73 = scmp.eq.s32.totalorder %s12, 0
      %p74 = por %p72, %p73
      %p75 = scmp.ne.s32.totalorder %s67, %s69
      %p76 = scmp.eq.s32.totalorder %s17, 1
      %p77 = por %p75, %p76
      %p78 = scmp.ne.s32.totalorder %s69, %s70
      %p79 = scmp.eq.s32.totalorder %s17, 0
      %p80 = por %p78, %p79
      %p81 = scmp.ne.s32.totalorder %s69, %s70
      %p82 = scmp.eq.s32.totalorder %s18, 1
      %p83 = por %p81, %p82
      %p85 = scmp.ne.s32.totalorder %s70, %s84
      %p86 = scmp.eq.s32.totalorder %s18, 0
      %p87 = por %p85, %p86
      %s88 = ssub.s32 %s12, %s19
      %p89 = scmp.eq.s32.totalorder %s88, 0
      %s91 = sadd.s32 %s90, 1
      %s92 = scalar_select %p89, %s90, %s91
      %p95 = pneg %p89
      %p96 = scmp.eq.s32.totalorder %s12, 1
      %p97 = por %p95, %p96
      %p98 = scmp.ne.s32.totalorder %s90, %s93
      %p99 = scmp.eq.s32.totalorder %s12, 0
      %p100 = por %p98, %p99
      %p101 = scmp.ne.s32.totalorder %s90, %s93
      %p102 = scmp.eq.s32.totalorder %s17, 1
      %p103 = por %p101, %p102
      %p104 = scmp.ne.s32.totalorder %s93, %s94
      %p105 = scmp.eq.s32.totalorder %s17, 0
      %p106 = por %p104, %p105
      %p107 = scmp.ne.s32.totalorder %s93, %s94
      %p108 = scmp.eq.s32.totalorder %s18, 1
      %p109 = por %p107, %p108
      %p111 = scmp.ne.s32.totalorder %s94, %s110
      %p112 = scmp.eq.s32.totalorder %s18, 0
      %p113 = por %p111, %p112
      %p114 = scmp.le.s32.totalorder 1, %s12
      %p115 = scmp.lt.s32.totalorder %s12, 3
      %p116 = pnand %p114, %p115
      %p117 = pneg %p116
      // Predicated region
      $region9: #{tpu_custom_call.1} parent=5 // pred_check
        _
      $region10: #{tpu_custom_call.1} parent=5 // pred_check_branch
        %119 = sbr.rel (%p116) target = $region12
      $region11: #{tpu_custom_call.1} parent=5 // pred_region
        %s120 = ssub.s32 %s12, 1
        // Predicated region
        $region13: #{tpu_custom_call.1} parent=11 // pred_check
          %p121 = pneg %p59
        $region14: #{tpu_custom_call.1} parent=11 // pred_check_branch
          %123 = sbr.rel (%p121) target = $region16
        $region15: #{tpu_custom_call.1} parent=11 // pred_region
          _
        $region16: #{tpu_custom_call.1} parent=11 // pred_fallthru
          _
        // Predicated region
        $region17: #{tpu_custom_call.1} parent=11 // pred_check
          %p124 = pneg %p80
        $region18: #{tpu_custom_call.1} parent=11 // pred_check_branch
          %126 = sbr.rel (%p124) target = $region20
        $region19: #{tpu_custom_call.1} parent=11 // pred_region
          _
        $region20: #{tpu_custom_call.1} parent=11 // pred_fallthru
          _
      $region12: #{tpu_custom_call.1} parent=5 // pred_fallthru
        _
      %p127 = scmp.lt.s32.totalorder %s12, 2
      // Predicated region
      $region21: #{tpu_custom_call.1} parent=5 // pred_check
        %p128 = pneg %p127
      $region22: #{tpu_custom_call.1} parent=5 // pred_check_branch
        %130 = sbr.rel (%p128) target = $region24
      $region23: #{tpu_custom_call.1} parent=5 // pred_region
        // Predicated region
        $region25: #{tpu_custom_call.1} parent=23 // pred_check
          %p131 = pneg %p32
        $region26: #{tpu_custom_call.1} parent=23 // pred_check_branch
          %133 = sbr.rel (%p131) target = $region28
        $region27: #{tpu_custom_call.1} parent=23 // pred_region
          %p134 = scmp.lt.s32.totalorder %s12, 1
          %s135 = scalar_select %p134, %s12, 1
          %s136 = smul.addr %s135, 54
          %s137 = smul.addr %s136, 4
          %s138 = scalar_lea.vmem %s0, %s137
        $region28: #{tpu_custom_call.1} parent=23 // pred_fallthru
          _
      $region24: #{tpu_custom_call.1} parent=5 // pred_fallthru
        _
      %p139 = scmp.le.s32.totalorder 1, %s12
      %p140 = scmp.lt.s32.totalorder %s12, 3
      %p141 = pnand %p139, %p140
      %p142 = pneg %p141
      // Predicated region
      $region29: #{tpu_custom_call.1} parent=5 // pred_check
        _
      $region30: #{tpu_custom_call.1} parent=5 // pred_check_branch
        %144 = sbr.rel (%p141) target = $region32
      $region31: #{tpu_custom_call.1} parent=5 // pred_region
        %s145 = ssub.s32 %s12, 1
        %p146 = scmp.lt.s32.totalorder %s17, 1
        %s147 = scalar_select %p146, %s17, 1
        %s148 = smul.addr %s147, 54
        %s149 = smul.addr %s148, 4
        %s150 = scalar_lea.vmem %s0, %s149
        %p151 = pneg %p38
        %p152 = pneg %p35
        %p153 = pneg %p59
        %p154 = pneg %p56
        %p155 = pneg %p80
        %p156 = pneg %p77
        %p157 = pneg %p106
        %p158 = pneg %p103
        %s159 = sand.u32 %s93, 1
        %s160 = scalar_lea.sflag [#allocation3], %s159
        %s161 = sand.u32 %s93, 1
        %s162 = smul.addr %s161, 128
        %s163 = scalar_lea.vmem [#allocation2], %s162
        %p164 = scmp.lt.s32.totalorder %s17, 1
        %s165 = scalar_select %p164, %s17, 1
        %s166 = smul.addr %s165, 54
        %s167 = smul.addr %s166, 4
        %s168 = scalar_lea.vmem %s0, %s167
        %v170 = vld [vmem:[%s168] sm:$0xf]
        %v171 = vld [vmem:[%s168 + $0x4] sm:$0xf]
        %v172 = vld [vmem:[%s168 + $0xc] sm:$0xf]
        %v173 = vld [vmem:[%s168 + $0x10] sm:$0xf]
        %v174 = vld [vmem:[%s168 + $0x18] sm:$0xf]
        %v175 = vld [vmem:[%s168 + $0x1c] sm:$0xf]
        %v176 = vld [vmem:[%s168 + $0x24] sm:$0xf]
        %v177 = vld [vmem:[%s168 + $0x28] sm:$0xf]
        %v178 = vld [vmem:[%s168 + $0x30] sm:$0xf]
        %v179 = vld [vmem:[%s168 + $0x34] sm:$0xf]
        %v180 = vld [vmem:[%s168 + $0x3c] sm:$0xf]
        %v181 = vld [vmem:[%s168 + $0x40] sm:$0xf]
        %v182 = vld [vmem:[%s168 + $0x48] sm:$0xf]
        %v183 = vld [vmem:[%s168 + $0x4c] sm:$0xf]
        %v184 = vld [vmem:[%s168 + $0x54] sm:$0xf]
        %v185 = vld [vmem:[%s168 + $0x58] sm:$0xf]
        %v186 = vld [vmem:[%s168 + $0x60] sm:$0xf]
        %v187 = vld [vmem:[%s168 + $0x64] sm:$0xf]
        %v188 = vld [vmem:[%s168 + $0x6c] sm:$0xf]
        %v189 = vld [vmem:[%s168 + $0x70] sm:$0xf]
        %v190 = vld [vmem:[%s168 + $0x78] sm:$0xf]
        %v191 = vld [vmem:[%s168 + $0x7c] sm:$0xf]
        %v192 = vld [vmem:[%s168 + $0x84] sm:$0xf]
        %v193 = vld [vmem:[%s168 + $0x88] sm:$0xf]
        %v194 = vld [vmem:[%s168 + $0x90] sm:$0xf]
        %v195 = vld [vmem:[%s168 + $0x94] sm:$0xf]
        %v196 = vld [vmem:[%s168 + $0x9c] sm:$0xf]
        %v197 = vld [vmem:[%s168 + $0xa0] sm:$0xf]
        %v198 = vld [vmem:[%s168 + $0xa8] sm:$0xf]
        %v199 = vld [vmem:[%s168 + $0xac] sm:$0xf]
        %v200 = vld [vmem:[%s168 + $0xb4] sm:$0xf]
        %v201 = vld [vmem:[%s168 + $0xb8] sm:$0xf]
        %v202 = vld [vmem:[%s168 + $0xc0] sm:$0xf]
        %v203 = vld [vmem:[%s168 + $0xc4] sm:$0xf]
        %v204 = vld [vmem:[%s168 + $0xcc] sm:$0xf]
        %v205 = vld [vmem:[%s168 + $0xd0] sm:$0xf]
        %v206 = vld [vmem:[%s168 + $0x8] sm:$0x1]
        %v207 = vld [vmem:[%s168 + $0x14] sm:$0x1]
        %v208 = vld [vmem:[%s168 + $0x20] sm:$0x1]
        %v209 = vld [vmem:[%s168 + $0x2c] sm:$0x1]
        %v210 = vld [vmem:[%s168 + $0x38] sm:$0x1]
        %v211 = vld [vmem:[%s168 + $0x44] sm:$0x1]
        %v212 = vld [vmem:[%s168 + $0x50] sm:$0x1]
        %v213 = vld [vmem:[%s168 + $0x5c] sm:$0x1]
        %v214 = vld [vmem:[%s168 + $0x68] sm:$0x1]
        %v215 = vld [vmem:[%s168 + $0x74] sm:$0x1]
        %v216 = vld [vmem:[%s168 + $0x80] sm:$0x1]
        %v217 = vld [vmem:[%s168 + $0x8c] sm:$0x1]
        %v218 = vld [vmem:[%s168 + $0x98] sm:$0x1]
        %v219 = vld [vmem:[%s168 + $0xa4] sm:$0x1]
        %v220 = vld [vmem:[%s168 + $0xb0] sm:$0x1]
        %v221 = vld [vmem:[%s168 + $0xbc] sm:$0x1]
        %v222 = vld [vmem:[%s168 + $0xc8] sm:$0x1]
        %v223 = vld [vmem:[%s168 + $0xd4] sm:$0x1]
        %v224 = vld [vmem:[%s168] sm:$0xe]
        %v225 = vld [vmem:[%s168 + $0xc] sm:$0xe]
        %v226 = vld [vmem:[%s168 + $0x18] sm:$0xe]
        %v227 = vld [vmem:[%s168 + $0x24] sm:$0xe]
        %v228 = vld [vmem:[%s168 + $0x30] sm:$0xe]
        %v229 = vld [vmem:[%s168 + $0x3c] sm:$0xe]
        %v230 = vld [vmem:[%s168 + $0x48] sm:$0xe]
        %v231 = vld [vmem:[%s168 + $0x54] sm:$0xe]
        %v232 = vld [vmem:[%s168 + $0x60] sm:$0xe]
        %v233 = vld [vmem:[%s168 + $0x6c] sm:$0xe]
        %v234 = vld [vmem:[%s168 + $0x78] sm:$0xe]
        %v235 = vld [vmem:[%s168 + $0x84] sm:$0xe]
        %v236 = vld [vmem:[%s168 + $0x90] sm:$0xe]
        %v237 = vld [vmem:[%s168 + $0x9c] sm:$0xe]
        %v238 = vld [vmem:[%s168 + $0xa8] sm:$0xe]
        %v239 = vld [vmem:[%s168 + $0xb4] sm:$0xe]
        %v240 = vld [vmem:[%s168 + $0xc0] sm:$0xe]
        %v241 = vld [vmem:[%s168 + $0xcc] sm:$0xe]
        %vm242 = vsmask.f32 3328
        %vm243 = vsmask.f32 7440
        %vm244 = vmor %vm242, %vm243
        %v246 = vshrl.u32 %v170, 16
        %v248 = vrot.slane %v246, 4
        %v249 = vshll.u32 %v170, 16
        %v251 = vrot.slane %v249, 5
        %v252 = vor.u32 %v248, %v251
        %v253 = vrot.slane %v252, 4
        %v255 = vshll.u32 %v171, 16
        %v257 = vrot.slane %v255, 5
        %v258 = vsel %vm244, %v253, %v257
        %v259 = vshrl.u32 %v171, 16
        %v261 = vrot.slane %v259, 4
        %v262 = vor.u32 %v261, %v257
        %v263 = vrot.slane %v262, 4
        %v265 = vshll.u32 %v206, 16
        %v267 = vrot.slane %v265, 5
        %v268 = vsel %vm244, %v263, %v267
        %v270 = vshrl.u32 %v172, 16
        %v272 = vrot.slane %v270, 4
        %v273 = vshll.u32 %v172, 16
        %v275 = vrot.slane %v273, 5
        %v276 = vor.u32 %v272, %v275
        %v277 = vrot.slane %v276, 4
        %v279 = vshll.u32 %v173, 16
        %v281 = vrot.slane %v279, 5
        %v282 = vsel %vm244, %v277, %v281
        %v283 = vshrl.u32 %v173, 16
        %v285 = vrot.slane %v283, 4
        %v286 = vor.u32 %v285, %v281
        %v287 = vrot.slane %v286, 4
        %v289 = vshll.u32 %v207, 16
        %v291 = vrot.slane %v289, 5
        %v292 = vsel %vm244, %v287, %v291
        %v294 = vshrl.u32 %v174, 16
        %v296 = vrot.slane %v294, 4
        %v297 = vshll.u32 %v174, 16
        %v299 = vrot.slane %v297, 5
        %v300 = vor.u32 %v296, %v299
        %v301 = vrot.slane %v300, 4
        %v303 = vshll.u32 %v175, 16
        %v305 = vrot.slane %v303, 5
        %v306 = vsel %vm244, %v301, %v305
        %v307 = vshrl.u32 %v175, 16
        %v309 = vrot.slane %v307, 4
        %v310 = vor.u32 %v309, %v305
        %v311 = vrot.slane %v310, 4
        %v313 = vshll.u32 %v208, 16
        %v315 = vrot.slane %v313, 5
        %v316 = vsel %vm244, %v311, %v315
        %v318 = vshrl.u32 %v176, 16
        %v320 = vrot.slane %v318, 4
        %v321 = vshll.u32 %v176, 16
        %v323 = vrot.slane %v321, 5
        %v324 = vor.u32 %v320, %v323
        %v325 = vrot.slane %v324, 4
        %v327 = vshll.u32 %v177, 16
        %v329 = vrot.slane %v327, 5
        %v330 = vsel %vm244, %v325, %v329
        %v331 = vshrl.u32 %v177, 16
        %v333 = vrot.slane %v331, 4
        %v334 = vor.u32 %v333, %v329
        %v335 = vrot.slane %v334, 4
        %v337 = vshll.u32 %v209, 16
        %v339 = vrot.slane %v337, 5
        %v340 = vsel %vm244, %v335, %v339
        %v342 = vshrl.u32 %v178, 16
        %v344 = vrot.slane %v342, 4
        %v345 = vshll.u32 %v178, 16
        %v347 = vrot.slane %v345, 5
        %v348 = vor.u32 %v344, %v347
        %v349 = vrot.slane %v348, 4
        %v351 = vshll.u32 %v179, 16
        %v353 = vrot.slane %v351, 5
        %v354 = vsel %vm244, %v349, %v353
        %v355 = vshrl.u32 %v179, 16
        %v357 = vrot.slane %v355, 4
        %v358 = vor.u32 %v357, %v353
        %v359 = vrot.slane %v358, 4
        %v361 = vshll.u32 %v210, 16
        %v363 = vrot.slane %v361, 5
        %v364 = vsel %vm244, %v359, %v363
        %v366 = vshrl.u32 %v180, 16
        %v368 = vrot.slane %v366, 4
        %v369 = vshll.u32 %v180, 16
        %v371 = vrot.slane %v369, 5
        %v372 = vor.u32 %v368, %v371
        %v373 = vrot.slane %v372, 4
        %v375 = vshll.u32 %v181, 16
        %v377 = vrot.slane %v375, 5
        %v378 = vsel %vm244, %v373, %v377
        %v379 = vshrl.u32 %v181, 16
        %v381 = vrot.slane %v379, 4
        %v382 = vor.u32 %v381, %v377
        %v383 = vrot.slane %v382, 4
        %v385 = vshll.u32 %v211, 16
        %v387 = vrot.slane %v385, 5
        %v388 = vsel %vm244, %v383, %v387
        %v390 = vshrl.u32 %v182, 16
        %v392 = vrot.slane %v390, 4
        %v393 = vshll.u32 %v182, 16
        %v395 = vrot.slane %v393, 5
        %v396 = vor.u32 %v392, %v395
        %v397 = vrot.slane %v396, 4
        %v399 = vshll.u32 %v183, 16
        %v401 = vrot.slane %v399, 5
        %v402 = vsel %vm244, %v397, %v401
        %v403 = vshrl.u32 %v183, 16
        %v405 = vrot.slane %v403, 4
        %v406 = vor.u32 %v405, %v401
        %v407 = vrot.slane %v406, 4
        %v409 = vshll.u32 %v212, 16
        %v411 = vrot.slane %v409, 5
        %v412 = vsel %vm244, %v407, %v411
        %v414 = vshrl.u32 %v184, 16
        %v416 = vrot.slane %v414, 4
        %v417 = vshll.u32 %v184, 16
        %v419 = vrot.slane %v417, 5
        %v420 = vor.u32 %v416, %v419
        %v421 = vrot.slane %v420, 4
        %v423 = vshll.u32 %v185, 16
        %v425 = vrot.slane %v423, 5
        %v426 = vsel %vm244, %v421, %v425
        %v427 = vshrl.u32 %v185, 16
        %v429 = vrot.slane %v427, 4
        %v430 = vor.u32 %v429, %v425
        %v431 = vrot.slane %v430, 4
        %v433 = vshll.u32 %v213, 16
        %v435 = vrot.slane %v433, 5
        %v436 = vsel %vm244, %v431, %v435
        %v438 = vshrl.u32 %v186, 16
        %v440 = vrot.slane %v438, 4
        %v441 = vshll.u32 %v186, 16
        %v443 = vrot.slane %v441, 5
        %v444 = vor.u32 %v440, %v443
        %v445 = vrot.slane %v444, 4
        %v447 = vshll.u32 %v187, 16
        %v449 = vrot.slane %v447, 5
        %v450 = vsel %vm244, %v445, %v449
        %v451 = vshrl.u32 %v187, 16
        %v453 = vrot.slane %v451, 4
        %v454 = vor.u32 %v453, %v449
        %v455 = vrot.slane %v454, 4
        %v457 = vshll.u32 %v214, 16
        %v459 = vrot.slane %v457, 5
        %v460 = vsel %vm244, %v455, %v459
        %v462 = vshrl.u32 %v188, 16
        %v464 = vrot.slane %v462, 4
        %v465 = vshll.u32 %v188, 16
        %v467 = vrot.slane %v465, 5
        %v468 = vor.u32 %v464, %v467
        %v469 = vrot.slane %v468, 4
        %v471 = vshll.u32 %v189, 16
        %v473 = vrot.slane %v471, 5
        %v474 = vsel %vm244, %v469, %v473
        %v475 = vshrl.u32 %v189, 16
        %v477 = vrot.slane %v475, 4
        %v478 = vor.u32 %v477, %v473
        %v479 = vrot.slane %v478, 4
        %v481 = vshll.u32 %v215, 16
        %v483 = vrot.slane %v481, 5
        %v484 = vsel %vm244, %v479, %v483
        %v486 = vshrl.u32 %v190, 16
        %v488 = vrot.slane %v486, 4
        %v489 = vshll.u32 %v190, 16
        %v491 = vrot.slane %v489, 5
        %v492 = vor.u32 %v488, %v491
        %v493 = vrot.slane %v492, 4
        %v495 = vshll.u32 %v191, 16
        %v497 = vrot.slane %v495, 5
        %v498 = vsel %vm244, %v493, %v497
        %v499 = vshrl.u32 %v191, 16
        %v501 = vrot.slane %v499, 4
        %v502 = vor.u32 %v501, %v497
        %v503 = vrot.slane %v502, 4
        %v505 = vshll.u32 %v216, 16
        %v507 = vrot.slane %v505, 5
        %v508 = vsel %vm244, %v503, %v507
        %v510 = vshrl.u32 %v192, 16
        %v512 = vrot.slane %v510, 4
        %v513 = vshll.u32 %v192, 16
        %v515 = vrot.slane %v513, 5
        %v516 = vor.u32 %v512, %v515
        %v517 = vrot.slane %v516, 4
        %v519 = vshll.u32 %v193, 16
        %v521 = vrot.slane %v519, 5
        %v522 = vsel %vm244, %v517, %v521
        %v523 = vshrl.u32 %v193, 16
        %v525 = vrot.slane %v523, 4
        %v526 = vor.u32 %v525, %v521
        %v527 = vrot.slane %v526, 4
        %v529 = vshll.u32 %v217, 16
        %v531 = vrot.slane %v529, 5
        %v532 = vsel %vm244, %v527, %v531
        %v534 = vshrl.u32 %v194, 16
        %v536 = vrot.slane %v534, 4
        %v537 = vshll.u32 %v194, 16
        %v539 = vrot.slane %v537, 5
        %v540 = vor.u32 %v536, %v539
        %v541 = vrot.slane %v540, 4
        %v543 = vshll.u32 %v195, 16
        %v545 = vrot.slane %v543, 5
        %v546 = vsel %vm244, %v541, %v545
        %v547 = vshrl.u32 %v195, 16
        %v549 = vrot.slane %v547, 4
        %v550 = vor.u32 %v549, %v545
        %v551 = vrot.slane %v550, 4
        %v553 = vshll.u32 %v218, 16
        %v555 = vrot.slane %v553, 5
        %v556 = vsel %vm244, %v551, %v555
        %v558 = vshrl.u32 %v196, 16
        %v560 = vrot.slane %v558, 4
        %v561 = vshll.u32 %v196, 16
        %v563 = vrot.slane %v561, 5
        %v564 = vor.u32 %v560, %v563
        %v565 = vrot.slane %v564, 4
        %v567 = vshll.u32 %v197, 16
        %v569 = vrot.slane %v567, 5
        %v570 = vsel %vm244, %v565, %v569
        %v571 = vshrl.u32 %v197, 16
        %v573 = vrot.slane %v571, 4
        %v574 = vor.u32 %v573, %v569
        %v575 = vrot.slane %v574, 4
        %v577 = vshll.u32 %v219, 16
        %v579 = vrot.slane %v577, 5
        %v580 = vsel %vm244, %v575, %v579
        %v582 = vshrl.u32 %v198, 16
        %v584 = vrot.slane %v582, 4
        %v585 = vshll.u32 %v198, 16
        %v587 = vrot.slane %v585, 5
        %v588 = vor.u32 %v584, %v587
        %v589 = vrot.slane %v588, 4
        %v591 = vshll.u32 %v199, 16
        %v593 = vrot.slane %v591, 5
        %v594 = vsel %vm244, %v589, %v593
        %v595 = vshrl.u32 %v199, 16
        %v597 = vrot.slane %v595, 4
        %v598 = vor.u32 %v597, %v593
        %v599 = vrot.slane %v598, 4
        %v601 = vshll.u32 %v220, 16
        %v603 = vrot.slane %v601, 5
        %v604 = vsel %vm244, %v599, %v603
        %v606 = vshrl.u32 %v200, 16
        %v608 = vrot.slane %v606, 4
        %v609 = vshll.u32 %v200, 16
        %v611 = vrot.slane %v609, 5
        %v612 = vor.u32 %v608, %v611
        %v613 = vrot.slane %v612, 4
        %v615 = vshll.u32 %v201, 16
        %v617 = vrot.slane %v615, 5
        %v618 = vsel %vm244, %v613, %v617
        %v619 = vshrl.u32 %v201, 16
        %v621 = vrot.slane %v619, 4
        %v622 = vor.u32 %v621, %v617
        %v623 = vrot.slane %v622, 4
        %v625 = vshll.u32 %v221, 16
        %v627 = vrot.slane %v625, 5
        %v628 = vsel %vm244, %v623, %v627
        %vm677 = vcmask 1042432
        %vm678 = vcmask 1046532
        %vm679 = vmor %vm677, %vm678
        %v680 = vrot.slane %v224, 5
        %v681 = vrot.slane %v680, 4
        %v682 = vrot.slane %v171, 5
        %v683 = vsel %vm679, %v681, %v682
        %v684 = vrot.slane %v682, 4
        %v685 = vrot.slane %v206, 5
        %v686 = vsel %vm679, %v684, %v685
        %v687 = vrot.slane %v225, 5
        %v688 = vrot.slane %v687, 4
        %v689 = vrot.slane %v173, 5
        %v690 = vsel %vm679, %v688, %v689
        %v691 = vrot.slane %v689, 4
        %v692 = vrot.slane %v207, 5
        %v693 = vsel %vm679, %v691, %v692
        %v694 = vrot.slane %v226, 5
        %v695 = vrot.slane %v694, 4
        %v696 = vrot.slane %v175, 5
        %v697 = vsel %vm679, %v695, %v696
        %v698 = vrot.slane %v696, 4
        %v699 = vrot.slane %v208, 5
        %v700 = vsel %vm679, %v698, %v699
        %v701 = vrot.slane %v227, 5
        %v702 = vrot.slane %v701, 4
        %v703 = vrot.slane %v177, 5
        %v704 = vsel %vm679, %v702, %v703
        %v705 = vrot.slane %v703, 4
        %v706 = vrot.slane %v209, 5
        %v707 = vsel %vm679, %v705, %v706
        %v708 = vrot.slane %v228, 5
        %v709 = vrot.slane %v708, 4
        %v710 = vrot.slane %v179, 5
        %v711 = vsel %vm679, %v709, %v710
        %v712 = vrot.slane %v710, 4
        %v713 = vrot.slane %v210, 5
        %v714 = vsel %vm679, %v712, %v713
        %v715 = vrot.slane %v229, 5
        %v716 = vrot.slane %v715, 4
        %v717 = vrot.slane %v181, 5
        %v718 = vsel %vm679, %v716, %v717
        %v719 = vrot.slane %v717, 4
        %v720 = vrot.slane %v211, 5
        %v721 = vsel %vm679, %v719, %v720
        %v722 = vrot.slane %v230, 5
        %v723 = vrot.slane %v722, 4
        %v724 = vrot.slane %v183, 5
        %v725 = vsel %vm679, %v723, %v724
        %v726 = vrot.slane %v724, 4
        %v727 = vrot.slane %v212, 5
        %v728 = vsel %vm679, %v726, %v727
        %v729 = vrot.slane %v231, 5
        %v730 = vrot.slane %v729, 4
        %v731 = vrot.slane %v185, 5
        %v732 = vsel %vm679, %v730, %v731
        %v733 = vrot.slane %v731, 4
        %v734 = vrot.slane %v213, 5
        %v735 = vsel %vm679, %v733, %v734
        %v736 = vrot.slane %v232, 5
        %v737 = vrot.slane %v736, 4
        %v738 = vrot.slane %v187, 5
        %v739 = vsel %vm679, %v737, %v738
        %v740 = vrot.slane %v738, 4
        %v741 = vrot.slane %v214, 5
        %v742 = vsel %vm679, %v740, %v741
        %v743 = vrot.slane %v233, 5
        %v744 = vrot.slane %v743, 4
        %v745 = vrot.slane %v189, 5
        %v746 = vsel %vm679, %v744, %v745
        %v747 = vrot.slane %v745, 4
        %v748 = vrot.slane %v215, 5
        %v749 = vsel %vm679, %v747, %v748
        %v750 = vrot.slane %v234, 5
        %v751 = vrot.slane %v750, 4
        %v752 = vrot.slane %v191, 5
        %v753 = vsel %vm679, %v751, %v752
        %v754 = vrot.slane %v752, 4
        %v755 = vrot.slane %v216, 5
        %v756 = vsel %vm679, %v754, %v755
        %v757 = vrot.slane %v235, 5
        %v758 = vrot.slane %v757, 4
        %v759 = vrot.slane %v193, 5
        %v760 = vsel %vm679, %v758, %v759
        %v761 = vrot.slane %v759, 4
        %v762 = vrot.slane %v217, 5
        %v763 = vsel %vm679, %v761, %v762
        %v764 = vrot.slane %v236, 5
        %v765 = vrot.slane %v764, 4
        %v766 = vrot.slane %v195, 5
        %v767 = vsel %vm679, %v765, %v766
        %v768 = vrot.slane %v766, 4
        %v769 = vrot.slane %v218, 5
        %v770 = vsel %vm679, %v768, %v769
        %v771 = vrot.slane %v237, 5
        %v772 = vrot.slane %v771, 4
        %v773 = vrot.slane %v197, 5
        %v774 = vsel %vm679, %v772, %v773
        %v775 = vrot.slane %v773, 4
        %v776 = vrot.slane %v219, 5
        %v777 = vsel %vm679, %v775, %v776
        %v778 = vrot.slane %v238, 5
        %v779 = vrot.slane %v778, 4
        %v780 = vrot.slane %v199, 5
        %v781 = vsel %vm679, %v779, %v780
        %v782 = vrot.slane %v780, 4
        %v783 = vrot.slane %v220, 5
        %v784 = vsel %vm679, %v782, %v783
        %v785 = vrot.slane %v239, 5
        %v786 = vrot.slane %v785, 4
        %v787 = vrot.slane %v201, 5
        %v788 = vsel %vm679, %v786, %v787
        %v789 = vrot.slane %v787, 4
        %v790 = vrot.slane %v221, 5
        %v791 = vsel %vm679, %v789, %v790
        %v793 = vshrl.u32 %v202, 16
        %v795 = vrot.slane %v793, 4
        %v796 = vshll.u32 %v202, 16
        %v798 = vrot.slane %v796, 5
        %v799 = vor.u32 %v795, %v798
        %v800 = vrot.slane %v799, 4
        %v802 = vshll.u32 %v203, 16
        %v804 = vrot.slane %v802, 5
        %v805 = vsel %vm244, %v800, %v804
        %v806 = vshrl.u32 %v203, 16
        %v808 = vrot.slane %v806, 4
        %v809 = vor.u32 %v808, %v804
        %v810 = vrot.slane %v809, 4
        %v812 = vshll.u32 %v222, 16
        %v814 = vrot.slane %v812, 5
        %v815 = vsel %vm244, %v810, %v814
        %v819 = vrot.slane %v240, 5
        %v820 = vrot.slane %v819, 4
        %v821 = vrot.slane %v203, 5
        %v822 = vsel %vm679, %v820, %v821
        %v823 = vrot.slane %v821, 4
        %v824 = vrot.slane %v222, 5
        %v825 = vsel %vm679, %v823, %v824
        %v827 = vshrl.u32 %v204, 16
        %v829 = vrot.slane %v827, 4
        %v830 = vshll.u32 %v204, 16
        %v832 = vrot.slane %v830, 5
        %v833 = vor.u32 %v829, %v832
        %v834 = vrot.slane %v833, 4
        %v836 = vshll.u32 %v205, 16
        %v838 = vrot.slane %v836, 5
        %v839 = vsel %vm244, %v834, %v838
        %v840 = vshrl.u32 %v205, 16
        %v842 = vrot.slane %v840, 4
        %v843 = vor.u32 %v842, %v838
        %v844 = vrot.slane %v843, 4
        %v846 = vshll.u32 %v223, 16
        %v848 = vrot.slane %v846, 5
        %v849 = vsel %vm244, %v844, %v848
        %v853 = vrot.slane %v241, 5
        %v854 = vrot.slane %v853, 4
        %v855 = vrot.slane %v205, 5
        %v856 = vsel %vm679, %v854, %v855
        %v857 = vrot.slane %v855, 4
        %v858 = vrot.slane %v223, 5
        %v859 = vsel %vm679, %v857, %v858
        %v876 = vunpack.c.l.b16 %v170
        %v877 = vunpack.c.l.b16 %v171
        %v878 = vunpack.c.l.b16 %v172
        %v879 = vunpack.c.l.b16 %v173
        %v880 = vunpack.c.l.b16 %v174
        %v881 = vunpack.c.l.b16 %v175
        %v882 = vunpack.c.l.b16 %v176
        %v883 = vunpack.c.l.b16 %v177
        %v884 = vunpack.c.l.b16 %v178
        %v885 = vunpack.c.l.b16 %v179
        %v886 = vunpack.c.l.b16 %v180
        %v887 = vunpack.c.l.b16 %v181
        %v888 = vunpack.c.l.b16 %v182
        %v889 = vunpack.c.l.b16 %v183
        %v890 = vunpack.c.l.b16 %v184
        %v891 = vunpack.c.l.b16 %v185
        %v892 = vunpack.c.l.b16 %v186
        %v893 = vunpack.c.l.b16 %v187
        %v894 = vunpack.c.l.b16 %v188
        %v895 = vunpack.c.l.b16 %v189
        %v896 = vunpack.c.l.b16 %v190
        %v897 = vunpack.c.l.b16 %v191
        %v898 = vunpack.c.l.b16 %v192
        %v899 = vunpack.c.l.b16 %v193
        %v900 = vunpack.c.l.b16 %v194
        %v901 = vunpack.c.l.b16 %v195
        %v902 = vunpack.c.l.b16 %v196
        %v903 = vunpack.c.l.b16 %v197
        %v904 = vunpack.c.l.b16 %v198
        %v905 = vunpack.c.l.b16 %v199
        %v906 = vunpack.c.l.b16 %v200
        %v907 = vunpack.c.l.b16 %v201
        %v908 = vpack.c.b16 %v877, %v876
        %v909 = vpack.c.b16 %v879, %v878
        %v910 = vpack.c.b16 %v881, %v880
        %v911 = vpack.c.b16 %v883, %v882
        %v912 = vpack.c.b16 %v885, %v884
        %v913 = vpack.c.b16 %v887, %v886
        %v914 = vpack.c.b16 %v889, %v888
        %v915 = vpack.c.b16 %v891, %v890
        %v916 = vpack.c.b16 %v893, %v892
        %v917 = vpack.c.b16 %v895, %v894
        %v918 = vpack.c.b16 %v897, %v896
        %v919 = vpack.c.b16 %v899, %v898
        %v920 = vpack.c.b16 %v901, %v900
        %v921 = vpack.c.b16 %v903, %v902
        %v922 = vpack.c.b16 %v905, %v904
        %v923 = vpack.c.b16 %v907, %v906
        %v940 = vunpack.c.l.b16 %v258
        %v941 = vunpack.c.l.b16 %v268
        %v942 = vunpack.c.l.b16 %v282
        %v943 = vunpack.c.l.b16 %v292
        %v944 = vunpack.c.l.b16 %v306
        %v945 = vunpack.c.l.b16 %v316
        %v946 = vunpack.c.l.b16 %v330
        %v947 = vunpack.c.l.b16 %v340
        %v948 = vunpack.c.l.b16 %v354
        %v949 = vunpack.c.l.b16 %v364
        %v950 = vunpack.c.l.b16 %v378
        %v951 = vunpack.c.l.b16 %v388
        %v952 = vunpack.c.l.b16 %v402
        %v953 = vunpack.c.l.b16 %v412
        %v954 = vunpack.c.l.b16 %v426
        %v955 = vunpack.c.l.b16 %v436
        %v956 = vunpack.c.l.b16 %v450
        %v957 = vunpack.c.l.b16 %v460
        %v958 = vunpack.c.l.b16 %v474
        %v959 = vunpack.c.l.b16 %v484
        %v960 = vunpack.c.l.b16 %v498
        %v961 = vunpack.c.l.b16 %v508
        %v962 = vunpack.c.l.b16 %v522
        %v963 = vunpack.c.l.b16 %v532
        %v964 = vunpack.c.l.b16 %v546
        %v965 = vunpack.c.l.b16 %v556
        %v966 = vunpack.c.l.b16 %v570
        %v967 = vunpack.c.l.b16 %v580
        %v968 = vunpack.c.l.b16 %v594
        %v969 = vunpack.c.l.b16 %v604
        %v970 = vunpack.c.l.b16 %v618
        %v971 = vunpack.c.l.b16 %v628
        %v972 = vpack.c.b16 %v941, %v940
        %v973 = vpack.c.b16 %v943, %v942
        %v974 = vpack.c.b16 %v945, %v944
        %v975 = vpack.c.b16 %v947, %v946
        %v976 = vpack.c.b16 %v949, %v948
        %v977 = vpack.c.b16 %v951, %v950
        %v978 = vpack.c.b16 %v953, %v952
        %v979 = vpack.c.b16 %v955, %v954
        %v980 = vpack.c.b16 %v957, %v956
        %v981 = vpack.c.b16 %v959, %v958
        %v982 = vpack.c.b16 %v961, %v960
        %v983 = vpack.c.b16 %v963, %v962
        %v984 = vpack.c.b16 %v965, %v964
        %v985 = vpack.c.b16 %v967, %v966
        %v986 = vpack.c.b16 %v969, %v968
        %v987 = vpack.c.b16 %v971, %v970
        %v1004 = vunpack.c.l.b16 %v683
        %v1005 = vunpack.c.l.b16 %v686
        %v1006 = vunpack.c.l.b16 %v690
        %v1007 = vunpack.c.l.b16 %v693
        %v1008 = vunpack.c.l.b16 %v697
        %v1009 = vunpack.c.l.b16 %v700
        %v1010 = vunpack.c.l.b16 %v704
        %v1011 = vunpack.c.l.b16 %v707
        %v1012 = vunpack.c.l.b16 %v711
        %v1013 = vunpack.c.l.b16 %v714
        %v1014 = vunpack.c.l.b16 %v718
        %v1015 = vunpack.c.l.b16 %v721
        %v1016 = vunpack.c.l.b16 %v725
        %v1017 = vunpack.c.l.b16 %v728
        %v1018 = vunpack.c.l.b16 %v732
        %v1019 = vunpack.c.l.b16 %v735
        %v1020 = vunpack.c.l.b16 %v739
        %v1021 = vunpack.c.l.b16 %v742
        %v1022 = vunpack.c.l.b16 %v746
        %v1023 = vunpack.c.l.b16 %v749
        %v1024 = vunpack.c.l.b16 %v753
        %v1025 = vunpack.c.l.b16 %v756
        %v1026 = vunpack.c.l.b16 %v760
        %v1027 = vunpack.c.l.b16 %v763
        %v1028 = vunpack.c.l.b16 %v767
        %v1029 = vunpack.c.l.b16 %v770
        %v1030 = vunpack.c.l.b16 %v774
        %v1031 = vunpack.c.l.b16 %v777
        %v1032 = vunpack.c.l.b16 %v781
        %v1033 = vunpack.c.l.b16 %v784
        %v1034 = vunpack.c.l.b16 %v788
        %v1035 = vunpack.c.l.b16 %v791
        %v1036 = vpack.c.b16 %v1005, %v1004
        %v1037 = vpack.c.b16 %v1007, %v1006
        %v1038 = vpack.c.b16 %v1009, %v1008
        %v1039 = vpack.c.b16 %v1011, %v1010
        %v1040 = vpack.c.b16 %v1013, %v1012
        %v1041 = vpack.c.b16 %v1015, %v1014
        %v1042 = vpack.c.b16 %v1017, %v1016
        %v1043 = vpack.c.b16 %v1019, %v1018
        %v1044 = vpack.c.b16 %v1021, %v1020
        %v1045 = vpack.c.b16 %v1023, %v1022
        %v1046 = vpack.c.b16 %v1025, %v1024
        %v1047 = vpack.c.b16 %v1027, %v1026
        %v1048 = vpack.c.b16 %v1029, %v1028
        %v1049 = vpack.c.b16 %v1031, %v1030
        %v1050 = vpack.c.b16 %v1033, %v1032
        %v1051 = vpack.c.b16 %v1035, %v1034
        %v1069 = vunpack.c.l.b16 %v202
        %v1070 = vunpack.c.l.b16 %v203
        %v1071 = vpack.c.b16 %v1070, %v1069
        %v1073 = vunpack.c.l.b16 %v805
        %v1074 = vunpack.c.l.b16 %v815
        %v1075 = vpack.c.b16 %v1074, %v1073
        %v1077 = vunpack.c.l.b16 %v822
        %v1078 = vunpack.c.l.b16 %v825
        %v1079 = vpack.c.b16 %v1078, %v1077
        %v1082 = vunpack.c.l.b16 %v204
        %v1083 = vunpack.c.l.b16 %v205
        %v1084 = vpack.c.b16 %v1083, %v1082
        %v1086 = vunpack.c.l.b16 %v839
        %v1087 = vunpack.c.l.b16 %v849
        %v1088 = vpack.c.b16 %v1087, %v1086
        %v1090 = vunpack.c.l.b16 %v856
        %v1091 = vunpack.c.l.b16 %v859
        %v1092 = vpack.c.b16 %v1091, %v1090
        %v1094 = vld [vmem:[%s1] sm:$0xf]
        %v1095 = vld [vmem:[%s1 + $0x4] sm:$0xf]
        %v1096 = vld [vmem:[%s1 + $0x8] sm:$0xf]
        %v1097 = vld [vmem:[%s1 + $0xc] sm:$0xf]
        %v1098 = vld [vmem:[%s1 + $0x10] sm:$0xf]
        %v1099 = vld [vmem:[%s1 + $0x14] sm:$0xf]
        %v1100 = vld [vmem:[%s1 + $0x18] sm:$0xf]
        %v1101 = vld [vmem:[%s1 + $0x1c] sm:$0xf]
        %v1102 = vld [vmem:[%s1 + $0x20] sm:$0xf]
        %v1103 = vld [vmem:[%s1 + $0x24] sm:$0xf]
        %v1104 = vld [vmem:[%s1 + $0x28] sm:$0xf]
        %v1105 = vld [vmem:[%s1 + $0x2c] sm:$0xf]
        %v1106 = vld [vmem:[%s1 + $0x30] sm:$0xf]
        %v1107 = vld [vmem:[%s1 + $0x34] sm:$0xf]
        %v1108 = vld [vmem:[%s1 + $0x38] sm:$0xf]
        %v1109 = vld [vmem:[%s1 + $0x3c] sm:$0xf]
        %v1110 = vld [vmem:[%s1 + $0x40] sm:$0xf]
        %v1111 = vld [vmem:[%s1 + $0x44] sm:$0xf]
        %v1112 = vld [vmem:[%s1 + $0x48] sm:$0xf]
        %v1113 = vld [vmem:[%s1 + $0x4c] sm:$0xf]
        %v1114 = vld [vmem:[%s1 + $0x50] sm:$0xf]
        %v1115 = vld [vmem:[%s1 + $0x54] sm:$0xf]
        %v1116 = vld [vmem:[%s1 + $0x58] sm:$0xf]
        %v1117 = vld [vmem:[%s1 + $0x5c] sm:$0xf]
        %v1118 = vld [vmem:[%s1 + $0x60] sm:$0xf]
        %v1119 = vld [vmem:[%s1 + $0x64] sm:$0xf]
        %v1120 = vld [vmem:[%s1 + $0x68] sm:$0xf]
        %v1121 = vld [vmem:[%s1 + $0x6c] sm:$0xf]
        %v1122 = vld [vmem:[%s1 + $0x70] sm:$0xf]
        %v1123 = vld [vmem:[%s1 + $0x74] sm:$0xf]
        %v1124 = vld [vmem:[%s1 + $0x78] sm:$0xf]
        %v1125 = vld [vmem:[%s1 + $0x7c] sm:$0xf]
        %v1126 = vld [vmem:[%s1 + $0x80] sm:$0xf]
        %v1127 = vld [vmem:[%s1 + $0x84] sm:$0xf]
        %v1128 = vld [vmem:[%s1 + $0x88] sm:$0xf]
        %v1129 = vld [vmem:[%s1 + $0x8c] sm:$0xf]
        %v1130 = vld [vmem:[%s1 + $0x90] sm:$0xf]
        %v1131 = vld [vmem:[%s1 + $0x94] sm:$0xf]
        %v1132 = vld [vmem:[%s1 + $0x98] sm:$0xf]
        %v1133 = vld [vmem:[%s1 + $0x9c] sm:$0xf]
        %v1134 = vld [vmem:[%s1 + $0xa0] sm:$0xf]
        %v1135 = vld [vmem:[%s1 + $0xa4] sm:$0xf]
        %v1136 = vld [vmem:[%s1 + $0xa8] sm:$0xf]
        %v1137 = vld [vmem:[%s1 + $0xac] sm:$0xf]
        %v1138 = vld [vmem:[%s1 + $0xb0] sm:$0xf]
        %v1139 = vld [vmem:[%s1 + $0xb4] sm:$0xf]
        %v1140 = vld [vmem:[%s1 + $0xb8] sm:$0xf]
        %v1141 = vld [vmem:[%s1 + $0xbc] sm:$0xf]
        %v1142 = vld [vmem:[%s1 + $0xc0] sm:$0xf]
        %v1143 = vld [vmem:[%s1 + $0xc4] sm:$0xf]
        %v1144 = vld [vmem:[%s1 + $0xc8] sm:$0xf]
        %v1145 = vld [vmem:[%s1 + $0xcc] sm:$0xf]
        %v1146 = vld [vmem:[%s1 + $0xd0] sm:$0xf]
        %v1147 = vld [vmem:[%s1 + $0xd4] sm:$0xf]
        %v1148 = vld [vmem:[%s1 + $0xd8] sm:$0xf]
        %v1149 = vld [vmem:[%s1 + $0xdc] sm:$0xf]
        %v1150 = vld [vmem:[%s1 + $0xe0] sm:$0xf]
        %v1151 = vld [vmem:[%s1 + $0xe4] sm:$0xf]
        %v1152 = vld [vmem:[%s1 + $0xe8] sm:$0xf]
        %v1153 = vld [vmem:[%s1 + $0xec] sm:$0xf]
        %v1154 = vld [vmem:[%s1 + $0xf0] sm:$0xf]
        %v1155 = vld [vmem:[%s1 + $0xf4] sm:$0xf]
        %v1156 = vld [vmem:[%s1 + $0xf8] sm:$0xf]
        %v1157 = vld [vmem:[%s1 + $0xfc] sm:$0xf]
        %v1158 = vld [vmem:[%s1 + $0x100] sm:$0xf]
        %v1159 = vld [vmem:[%s1 + $0x104] sm:$0xf]
        %v1160 = vld [vmem:[%s1 + $0x108] sm:$0xf]
        %v1161 = vld [vmem:[%s1 + $0x10c] sm:$0xf]
        %v1162 = vld [vmem:[%s1 + $0x110] sm:$0xf]
        %v1163 = vld [vmem:[%s1 + $0x114] sm:$0xf]
        %v1164 = vld [vmem:[%s1 + $0x118] sm:$0xf]
        %v1165 = vld [vmem:[%s1 + $0x11c] sm:$0xf]
        %v1166 = vld [vmem:[%s1 + $0x120] sm:$0xf]
        %v1167 = vld [vmem:[%s1 + $0x124] sm:$0xf]
        %v1168 = vld [vmem:[%s1 + $0x128] sm:$0xf]
        %v1169 = vld [vmem:[%s1 + $0x12c] sm:$0xf]
        %v1170 = vld [vmem:[%s1 + $0x130] sm:$0xf]
        %v1171 = vld [vmem:[%s1 + $0x134] sm:$0xf]
        %v1172 = vld [vmem:[%s1 + $0x138] sm:$0xf]
        %v1173 = vld [vmem:[%s1 + $0x13c] sm:$0xf]
        %v1174 = vld [vmem:[%s1 + $0x140] sm:$0xf]
        %v1175 = vld [vmem:[%s1 + $0x144] sm:$0xf]
        %v1176 = vld [vmem:[%s1 + $0x148] sm:$0xf]
        %v1177 = vld [vmem:[%s1 + $0x14c] sm:$0xf]
        %v1178 = vld [vmem:[%s1 + $0x150] sm:$0xf]
        %v1179 = vld [vmem:[%s1 + $0x154] sm:$0xf]
        %v1180 = vld [vmem:[%s1 + $0x158] sm:$0xf]
        %v1181 = vld [vmem:[%s1 + $0x15c] sm:$0xf]
        %v1182 = vld [vmem:[%s1 + $0x160] sm:$0xf]
        %v1183 = vld [vmem:[%s1 + $0x164] sm:$0xf]
        %v1184 = vld [vmem:[%s1 + $0x168] sm:$0xf]
        %v1185 = vld [vmem:[%s1 + $0x16c] sm:$0xf]
        %v1186 = vld [vmem:[%s1 + $0x170] sm:$0xf]
        %v1187 = vld [vmem:[%s1 + $0x174] sm:$0xf]
        %v1188 = vld [vmem:[%s1 + $0x178] sm:$0xf]
        %v1189 = vld [vmem:[%s1 + $0x17c] sm:$0xf]
        %v1190 = vld [vmem:[%s1 + $0x180] sm:$0xf]
        %v1191 = vld [vmem:[%s1 + $0x184] sm:$0xf]
        %v1192 = vld [vmem:[%s1 + $0x188] sm:$0xf]
        %v1193 = vld [vmem:[%s1 + $0x18c] sm:$0xf]
        %v1194 = vld [vmem:[%s1 + $0x190] sm:$0xf]
        %v1195 = vld [vmem:[%s1 + $0x194] sm:$0xf]
        %v1196 = vld [vmem:[%s1 + $0x198] sm:$0xf]
        %v1197 = vld [vmem:[%s1 + $0x19c] sm:$0xf]
        %v1198 = vld [vmem:[%s1 + $0x1a0] sm:$0xf]
        %v1199 = vld [vmem:[%s1 + $0x1a4] sm:$0xf]
        %v1200 = vld [vmem:[%s1 + $0x1a8] sm:$0xf]
        %v1201 = vld [vmem:[%s1 + $0x1ac] sm:$0xf]
        %v1202 = vld [vmem:[%s1 + $0x1b0] sm:$0xf]
        %v1203 = vld [vmem:[%s1 + $0x1b4] sm:$0xf]
        %v1204 = vld [vmem:[%s1 + $0x1b8] sm:$0xf]
        %v1205 = vld [vmem:[%s1 + $0x1bc] sm:$0xf]
        %v1206 = vld [vmem:[%s1 + $0x1c0] sm:$0xf]
        %v1207 = vld [vmem:[%s1 + $0x1c4] sm:$0xf]
        %v1208 = vld [vmem:[%s1 + $0x1c8] sm:$0xf]
        %v1209 = vld [vmem:[%s1 + $0x1cc] sm:$0xf]
        %v1210 = vld [vmem:[%s1 + $0x1d0] sm:$0xf]
        %v1211 = vld [vmem:[%s1 + $0x1d4] sm:$0xf]
        %v1212 = vld [vmem:[%s1 + $0x1d8] sm:$0xf]
        %v1213 = vld [vmem:[%s1 + $0x1dc] sm:$0xf]
        %v1214 = vld [vmem:[%s1 + $0x1e0] sm:$0xf]
        %v1215 = vld [vmem:[%s1 + $0x1e4] sm:$0xf]
        %v1216 = vld [vmem:[%s1 + $0x1e8] sm:$0xf]
        %v1217 = vld [vmem:[%s1 + $0x1ec] sm:$0xf]
        %v1218 = vld [vmem:[%s1 + $0x1f0] sm:$0xf]
        %v1219 = vld [vmem:[%s1 + $0x1f4] sm:$0xf]
        %v1220 = vld [vmem:[%s1 + $0x1f8] sm:$0xf]
        %v1221 = vld [vmem:[%s1 + $0x1fc] sm:$0xf]
        %v1222 = vld [vmem:[%s1 + $0x200] sm:$0xf]
        %v1223 = vld [vmem:[%s1 + $0x204] sm:$0xf]
        %v1224 = vld [vmem:[%s1 + $0x208] sm:$0xf]
        %v1225 = vld [vmem:[%s1 + $0x20c] sm:$0xf]
        %v1226 = vld [vmem:[%s1 + $0x210] sm:$0xf]
        %v1227 = vld [vmem:[%s1 + $0x214] sm:$0xf]
        %v1228 = vld [vmem:[%s1 + $0x218] sm:$0xf]
        %v1229 = vld [vmem:[%s1 + $0x21c] sm:$0xf]
        %v1230 = vld [vmem:[%s1 + $0x220] sm:$0xf]
        %v1231 = vld [vmem:[%s1 + $0x224] sm:$0xf]
        %v1232 = vld [vmem:[%s1 + $0x228] sm:$0xf]
        %v1233 = vld [vmem:[%s1 + $0x22c] sm:$0xf]
        %v1234 = vld [vmem:[%s1 + $0x230] sm:$0xf]
        %v1235 = vld [vmem:[%s1 + $0x234] sm:$0xf]
        %v1236 = vld [vmem:[%s1 + $0x238] sm:$0xf]
        %v1237 = vld [vmem:[%s1 + $0x23c] sm:$0xf]
        %v1238 = vld [vmem:[%s2] sm:$0x1]
        %v1240 = vlaneseq
        %v1241 = vshrl.u32 %v1240, 7
        %v1242 = vsub.s32 0, %v1241
        %v1243 = vrot.slane %v1238, %v1242
        %v1389 = vunpack.c.l.b16 %v1094
        %v1390 = vunpack.c.l.b16 %v1095
        %v1391 = vunpack.c.l.b16 %v1096
        %v1392 = vunpack.c.l.b16 %v1097
        %v1393 = vunpack.c.l.b16 %v1098
        %v1394 = vunpack.c.l.b16 %v1099
        %v1395 = vunpack.c.l.b16 %v1100
        %v1396 = vunpack.c.l.b16 %v1101
        %v1397 = vunpack.c.l.b16 %v1102
        %v1398 = vunpack.c.l.b16 %v1103
        %v1399 = vunpack.c.l.b16 %v1104
        %v1400 = vunpack.c.l.b16 %v1105
        %v1401 = vunpack.c.l.b16 %v1106
        %v1402 = vunpack.c.l.b16 %v1107
        %v1403 = vunpack.c.l.b16 %v1108
        %v1404 = vunpack.c.l.b16 %v1109
        %v1405 = vunpack.c.l.b16 %v1110
        %v1406 = vunpack.c.l.b16 %v1111
        %v1407 = vunpack.c.l.b16 %v1112
        %v1408 = vunpack.c.l.b16 %v1113
        %v1409 = vunpack.c.l.b16 %v1114
        %v1410 = vunpack.c.l.b16 %v1115
        %v1411 = vunpack.c.l.b16 %v1116
        %v1412 = vunpack.c.l.b16 %v1117
        %v1413 = vunpack.c.l.b16 %v1118
        %v1414 = vunpack.c.l.b16 %v1119
        %v1415 = vunpack.c.l.b16 %v1120
        %v1416 = vunpack.c.l.b16 %v1121
        %v1417 = vunpack.c.l.b16 %v1122
        %v1418 = vunpack.c.l.b16 %v1123
        %v1419 = vunpack.c.l.b16 %v1124
        %v1420 = vunpack.c.l.b16 %v1125
        %v1421 = vunpack.c.l.b16 %v1126
        %v1422 = vunpack.c.l.b16 %v1127
        %v1423 = vunpack.c.l.b16 %v1128
        %v1424 = vunpack.c.l.b16 %v1129
        %v1425 = vunpack.c.l.b16 %v1130
        %v1426 = vunpack.c.l.b16 %v1131
        %v1427 = vunpack.c.l.b16 %v1132
        %v1428 = vunpack.c.l.b16 %v1133
        %v1429 = vunpack.c.l.b16 %v1134
        %v1430 = vunpack.c.l.b16 %v1135
        %v1431 = vunpack.c.l.b16 %v1136
        %v1432 = vunpack.c.l.b16 %v1137
        %v1433 = vunpack.c.l.b16 %v1138
        %v1434 = vunpack.c.l.b16 %v1139
        %v1435 = vunpack.c.l.b16 %v1140
        %v1436 = vunpack.c.l.b16 %v1141
        %v1437 = vunpack.c.l.b16 %v1142
        %v1438 = vunpack.c.l.b16 %v1143
        %v1439 = vunpack.c.l.b16 %v1144
        %v1440 = vunpack.c.l.b16 %v1145
        %v1441 = vunpack.c.l.b16 %v1146
        %v1442 = vunpack.c.l.b16 %v1147
        %v1443 = vunpack.c.l.b16 %v1148
        %v1444 = vunpack.c.l.b16 %v1149
        %v1445 = vunpack.c.l.b16 %v1150
        %v1446 = vunpack.c.l.b16 %v1151
        %v1447 = vunpack.c.l.b16 %v1152
        %v1448 = vunpack.c.l.b16 %v1153
        %v1449 = vunpack.c.l.b16 %v1154
        %v1450 = vunpack.c.l.b16 %v1155
        %v1451 = vunpack.c.l.b16 %v1156
        %v1452 = vunpack.c.l.b16 %v1157
        %v1453 = vunpack.c.l.b16 %v1158
        %v1454 = vunpack.c.l.b16 %v1159
        %v1455 = vunpack.c.l.b16 %v1160
        %v1456 = vunpack.c.l.b16 %v1161
        %v1457 = vunpack.c.l.b16 %v1162
        %v1458 = vunpack.c.l.b16 %v1163
        %v1459 = vunpack.c.l.b16 %v1164
        %v1460 = vunpack.c.l.b16 %v1165
        %v1461 = vunpack.c.l.b16 %v1166
        %v1462 = vunpack.c.l.b16 %v1167
        %v1463 = vunpack.c.l.b16 %v1168
        %v1464 = vunpack.c.l.b16 %v1169
        %v1465 = vunpack.c.l.b16 %v1170
        %v1466 = vunpack.c.l.b16 %v1171
        %v1467 = vunpack.c.l.b16 %v1172
        %v1468 = vunpack.c.l.b16 %v1173
        %v1469 = vunpack.c.l.b16 %v1174
        %v1470 = vunpack.c.l.b16 %v1175
        %v1471 = vunpack.c.l.b16 %v1176
        %v1472 = vunpack.c.l.b16 %v1177
        %v1473 = vunpack.c.l.b16 %v1178
        %v1474 = vunpack.c.l.b16 %v1179
        %v1475 = vunpack.c.l.b16 %v1180
        %v1476 = vunpack.c.l.b16 %v1181
        %v1477 = vunpack.c.l.b16 %v1182
        %v1478 = vunpack.c.l.b16 %v1183
        %v1479 = vunpack.c.l.b16 %v1184
        %v1480 = vunpack.c.l.b16 %v1185
        %v1481 = vunpack.c.l.b16 %v1186
        %v1482 = vunpack.c.l.b16 %v1187
        %v1483 = vunpack.c.l.b16 %v1188
        %v1484 = vunpack.c.l.b16 %v1189
        %v1485 = vunpack.c.l.b16 %v1190
        %v1486 = vunpack.c.l.b16 %v1191
        %v1487 = vunpack.c.l.b16 %v1192
        %v1488 = vunpack.c.l.b16 %v1193
        %v1489 = vunpack.c.l.b16 %v1194
        %v1490 = vunpack.c.l.b16 %v1195
        %v1491 = vunpack.c.l.b16 %v1196
        %v1492 = vunpack.c.l.b16 %v1197
        %v1493 = vunpack.c.l.b16 %v1198
        %v1494 = vunpack.c.l.b16 %v1199
        %v1495 = vunpack.c.l.b16 %v1200
        %v1496 = vunpack.c.l.b16 %v1201
        %v1497 = vunpack.c.l.b16 %v1202
        %v1498 = vunpack.c.l.b16 %v1203
        %v1499 = vunpack.c.l.b16 %v1204
        %v1500 = vunpack.c.l.b16 %v1205
        %v1501 = vunpack.c.l.b16 %v1206
        %v1502 = vunpack.c.l.b16 %v1207
        %v1503 = vunpack.c.l.b16 %v1208
        %v1504 = vunpack.c.l.b16 %v1209
        %v1505 = vunpack.c.l.b16 %v1210
        %v1506 = vunpack.c.l.b16 %v1211
        %v1507 = vunpack.c.l.b16 %v1212
        %v1508 = vunpack.c.l.b16 %v1213
        %v1509 = vunpack.c.l.b16 %v1214
        %v1510 = vunpack.c.l.b16 %v1215
        %v1511 = vunpack.c.l.b16 %v1216
        %v1512 = vunpack.c.l.b16 %v1217
        %v1513 = vunpack.c.l.b16 %v1218
        %v1514 = vunpack.c.l.b16 %v1219
        %v1515 = vunpack.c.l.b16 %v1220
        %v1516 = vunpack.c.l.b16 %v1221
        %v1517 = vunpack.c.l.b16 %v1222
        %v1518 = vunpack.c.l.b16 %v1223
        %v1519 = vunpack.c.l.b16 %v1224
        %v1520 = vunpack.c.l.b16 %v1225
        %v1521 = vunpack.c.l.b16 %v1226
        %v1522 = vunpack.c.l.b16 %v1227
        %v1523 = vunpack.c.l.b16 %v1228
        %v1524 = vunpack.c.l.b16 %v1229
        %v1525 = vunpack.c.l.b16 %v1230
        %v1526 = vunpack.c.l.b16 %v1231
        %v1527 = vunpack.c.l.b16 %v1232
        %v1528 = vunpack.c.l.b16 %v1233
        %v1529 = vunpack.c.l.b16 %v1234
        %v1530 = vunpack.c.l.b16 %v1235
        %v1531 = vunpack.c.l.b16 %v1236
        %v1532 = vunpack.c.l.b16 %v1237
        %v1533 = vpack.c.b16 %v1390, %v1389
        %v1534 = vpack.c.b16 %v1392, %v1391
        %v1535 = vpack.c.b16 %v1394, %v1393
        %v1536 = vpack.c.b16 %v1396, %v1395
        %v1537 = vpack.c.b16 %v1398, %v1397
        %v1538 = vpack.c.b16 %v1400, %v1399
        %v1539 = vpack.c.b16 %v1402, %v1401
        %v1540 = vpack.c.b16 %v1404, %v1403
        %v1541 = vpack.c.b16 %v1406, %v1405
        %v1542 = vpack.c.b16 %v1408, %v1407
        %v1543 = vpack.c.b16 %v1410, %v1409
        %v1544 = vpack.c.b16 %v1412, %v1411
        %v1545 = vpack.c.b16 %v1414, %v1413
        %v1546 = vpack.c.b16 %v1416, %v1415
        %v1547 = vpack.c.b16 %v1418, %v1417
        %v1548 = vpack.c.b16 %v1420, %v1419
        %v1549 = vpack.c.b16 %v1422, %v1421
        %v1550 = vpack.c.b16 %v1424, %v1423
        %v1551 = vpack.c.b16 %v1426, %v1425
        %v1552 = vpack.c.b16 %v1428, %v1427
        %v1553 = vpack.c.b16 %v1430, %v1429
        %v1554 = vpack.c.b16 %v1432, %v1431
        %v1555 = vpack.c.b16 %v1434, %v1433
        %v1556 = vpack.c.b16 %v1436, %v1435
        %v1557 = vpack.c.b16 %v1438, %v1437
        %v1558 = vpack.c.b16 %v1440, %v1439
        %v1559 = vpack.c.b16 %v1442, %v1441
        %v1560 = vpack.c.b16 %v1444, %v1443
        %v1561 = vpack.c.b16 %v1446, %v1445
        %v1562 = vpack.c.b16 %v1448, %v1447
        %v1563 = vpack.c.b16 %v1450, %v1449
        %v1564 = vpack.c.b16 %v1452, %v1451
        %v1565 = vpack.c.b16 %v1454, %v1453
        %v1566 = vpack.c.b16 %v1456, %v1455
        %v1567 = vpack.c.b16 %v1458, %v1457
        %v1568 = vpack.c.b16 %v1460, %v1459
        %v1569 = vpack.c.b16 %v1462, %v1461
        %v1570 = vpack.c.b16 %v1464, %v1463
        %v1571 = vpack.c.b16 %v1466, %v1465
        %v1572 = vpack.c.b16 %v1468, %v1467
        %v1573 = vpack.c.b16 %v1470, %v1469
        %v1574 = vpack.c.b16 %v1472, %v1471
        %v1575 = vpack.c.b16 %v1474, %v1473
        %v1576 = vpack.c.b16 %v1476, %v1475
        %v1577 = vpack.c.b16 %v1478, %v1477
        %v1578 = vpack.c.b16 %v1480, %v1479
        %v1579 = vpack.c.b16 %v1482, %v1481
        %v1580 = vpack.c.b16 %v1484, %v1483
        %v1581 = vpack.c.b16 %v1486, %v1485
        %v1582 = vpack.c.b16 %v1488, %v1487
        %v1583 = vpack.c.b16 %v1490, %v1489
        %v1584 = vpack.c.b16 %v1492, %v1491
        %v1585 = vpack.c.b16 %v1494, %v1493
        %v1586 = vpack.c.b16 %v1496, %v1495
        %v1587 = vpack.c.b16 %v1498, %v1497
        %v1588 = vpack.c.b16 %v1500, %v1499
        %v1589 = vpack.c.b16 %v1502, %v1501
        %v1590 = vpack.c.b16 %v1504, %v1503
        %v1591 = vpack.c.b16 %v1506, %v1505
        %v1592 = vpack.c.b16 %v1508, %v1507
        %v1593 = vpack.c.b16 %v1510, %v1509
        %v1594 = vpack.c.b16 %v1512, %v1511
        %v1595 = vpack.c.b16 %v1514, %v1513
        %v1596 = vpack.c.b16 %v1516, %v1515
        %v1597 = vpack.c.b16 %v1518, %v1517
        %v1598 = vpack.c.b16 %v1520, %v1519
        %v1599 = vpack.c.b16 %v1522, %v1521
        %v1600 = vpack.c.b16 %v1524, %v1523
        %v1601 = vpack.c.b16 %v1526, %v1525
        %v1602 = vpack.c.b16 %v1528, %v1527
        %v1603 = vpack.c.b16 %v1530, %v1529
        %v1604 = vpack.c.b16 %v1532, %v1531
        %1677 = vmatprep.subr.bf16.mxu0 0
        %1678 = vmatpush1.bf16.msra.mxu0 %v1540
        %1679 = vmatprep.subr.bf16.mxu0 0
        %1680 = vmatpush1.bf16.msra.mxu0 %v1539
        %1681 = vmatprep.subr.bf16.mxu0 0
        %1682 = vmatpush1.bf16.msra.mxu0 %v1538
        %1683 = vmatprep.subr.bf16.mxu0 0
        %1684 = vmatpush1.bf16.msra.mxu0 %v1537
        %1685 = vmatprep.subr.bf16.mxu0 0
        %1686 = vmatpush1.bf16.msra.mxu0 %v1536
        %1687 = vmatprep.subr.bf16.mxu0 0
        %1688 = vmatpush1.bf16.msra.mxu0 %v1535
        %1689 = vmatprep.subr.bf16.mxu0 0
        %1690 = vmatpush1.bf16.msra.mxu0 %v1534
        %1691 = vmatprep.subr.bf16.mxu0 0
        %1692 = vmatpush1.bf16.msra.mxu0 %v1533
        %1693 = vmatprep.subr.bf16.mxu0 0
        %1694 = vmatpush2.bf16.msra.mxu0 %v1548
        %1695 = vmatprep.subr.bf16.mxu0 0
        %1696 = vmatpush2.bf16.msra.mxu0 %v1547
        %1697 = vmatprep.subr.bf16.mxu0 0
        %1698 = vmatpush2.bf16.msra.mxu0 %v1546
        %1699 = vmatprep.subr.bf16.mxu0 0
        %1700 = vmatpush2.bf16.msra.mxu0 %v1545
        %1701 = vmatprep.subr.bf16.mxu0 0
        %1702 = vmatpush2.bf16.msra.mxu0 %v1544
        %1703 = vmatprep.subr.bf16.mxu0 0
        %1704 = vmatpush2.bf16.msra.mxu0 %v1543
        %1705 = vmatprep.subr.bf16.mxu0 0
        %1706 = vmatpush2.bf16.msra.mxu0 %v1542
        %1707 = vmatprep.subr.bf16.mxu0 0
        %1708 = vmatpush2.bf16.msra.mxu0 %v1541
        %1709 = vmatprep.mubr.bf16.mxu0 %v972
        %1710 = vmatmul.mubr.bf16.gmra.mxu0 %v908
        %v1711 = vpop.f32.mrf.mxu0
        %v1712 = vadd.f32 %v1243, %v1711
        %v1713 = vpop.f32.mrf.mxu0
        %v1714 = vpop.f32.mrf.mxu0
        %v1715 = vadd.f32 %v1243, %v1714
        %v1716 = vpop.f32.mrf.mxu0
        %1717 = vmatprep.mubr.bf16.mxu0 %v973
        %1718 = vmatmul.mubr.bf16.gmra.mxu0 %v909
        %v1719 = vpop.f32.mrf.mxu0
        %v1720 = vadd.f32 %v1243, %v1719
        %v1721 = vpop.f32.mrf.mxu0
        %v1722 = vpop.f32.mrf.mxu0
        %v1723 = vadd.f32 %v1243, %v1722
        %v1724 = vpop.f32.mrf.mxu0
        %1725 = vmatprep.mubr.bf16.mxu0 %v974
        %1726 = vmatmul.mubr.bf16.gmra.mxu0 %v910
        %v1727 = vpop.f32.mrf.mxu0
        %v1728 = vadd.f32 %v1243, %v1727
        %v1729 = vpop.f32.mrf.mxu0
        %v1730 = vpop.f32.mrf.mxu0
        %v1731 = vadd.f32 %v1243, %v1730
        %v1732 = vpop.f32.mrf.mxu0
        %1733 = vmatprep.mubr.bf16.mxu0 %v975
        %1734 = vmatmul.mubr.bf16.gmra.mxu0 %v911
        %v1735 = vpop.f32.mrf.mxu0
        %v1736 = vadd.f32 %v1243, %v1735
        %v1737 = vpop.f32.mrf.mxu0
        %v1738 = vpop.f32.mrf.mxu0
        %v1739 = vadd.f32 %v1243, %v1738
        %v1740 = vpop.f32.mrf.mxu0
        %1741 = vmatprep.mubr.bf16.mxu0 %v976
        %1742 = vmatmul.mubr.bf16.gmra.mxu0 %v912
        %v1743 = vpop.f32.mrf.mxu0
        %v1744 = vadd.f32 %v1243, %v1743
        %v1745 = vpop.f32.mrf.mxu0
        %v1746 = vpop.f32.mrf.mxu0
        %v1747 = vadd.f32 %v1243, %v1746
        %v1748 = vpop.f32.mrf.mxu0
        %1749 = vmatprep.mubr.bf16.mxu0 %v977
        %1750 = vmatmul.mubr.bf16.gmra.mxu0 %v913
        %v1751 = vpop.f32.mrf.mxu0
        %v1752 = vadd.f32 %v1243, %v1751
        %v1753 = vpop.f32.mrf.mxu0
        %v1754 = vpop.f32.mrf.mxu0
        %v1755 = vadd.f32 %v1243, %v1754
        %v1756 = vpop.f32.mrf.mxu0
        %1757 = vmatprep.mubr.bf16.mxu0 %v978
        %1758 = vmatmul.mubr.bf16.gmra.mxu0 %v914
        %v1759 = vpop.f32.mrf.mxu0
        %v1760 = vadd.f32 %v1243, %v1759
        %v1761 = vpop.f32.mrf.mxu0
        %v1762 = vpop.f32.mrf.mxu0
        %v1763 = vadd.f32 %v1243, %v1762
        %v1764 = vpop.f32.mrf.mxu0
        %1765 = vmatprep.mubr.bf16.mxu0 %v979
        %1766 = vmatmul.mubr.bf16.gmra.mxu0 %v915
        %v1767 = vpop.f32.mrf.mxu0
        %v1768 = vadd.f32 %v1243, %v1767
        %v1769 = vpop.f32.mrf.mxu0
        %v1770 = vpop.f32.mrf.mxu0
        %v1771 = vadd.f32 %v1243, %v1770
        %v1772 = vpop.f32.mrf.mxu0
        %1773 = vmatprep.mubr.bf16.mxu0 %v980
        %1774 = vmatmul.mubr.bf16.gmra.mxu0 %v916
        %v1775 = vpop.f32.mrf.mxu0
        %v1776 = vadd.f32 %v1243, %v1775
        %v1777 = vpop.f32.mrf.mxu0
        %v1778 = vpop.f32.mrf.mxu0
        %v1779 = vadd.f32 %v1243, %v1778
        %v1780 = vpop.f32.mrf.mxu0
        %1781 = vmatprep.mubr.bf16.mxu0 %v981
        %1782 = vmatmul.mubr.bf16.gmra.mxu0 %v917
        %v1783 = vpop.f32.mrf.mxu0
        %v1784 = vadd.f32 %v1243, %v1783
        %v1785 = vpop.f32.mrf.mxu0
        %v1786 = vpop.f32.mrf.mxu0
        %v1787 = vadd.f32 %v1243, %v1786
        %v1788 = vpop.f32.mrf.mxu0
        %1789 = vmatprep.mubr.bf16.mxu0 %v982
        %1790 = vmatmul.mubr.bf16.gmra.mxu0 %v918
        %v1791 = vpop.f32.mrf.mxu0
        %v1792 = vadd.f32 %v1243, %v1791
        %v1793 = vpop.f32.mrf.mxu0
        %v1794 = vpop.f32.mrf.mxu0
        %v1795 = vadd.f32 %v1243, %v1794
        %v1796 = vpop.f32.mrf.mxu0
        %1797 = vmatprep.mubr.bf16.mxu0 %v983
        %1798 = vmatmul.mubr.bf16.gmra.mxu0 %v919
        %v1799 = vpop.f32.mrf.mxu0
        %v1800 = vadd.f32 %v1243, %v1799
        %v1801 = vpop.f32.mrf.mxu0
        %v1802 = vpop.f32.mrf.mxu0
        %v1803 = vadd.f32 %v1243, %v1802
        %v1804 = vpop.f32.mrf.mxu0
        %1805 = vmatprep.mubr.bf16.mxu0 %v984
        %1806 = vmatmul.mubr.bf16.gmra.mxu0 %v920
        %v1807 = vpop.f32.mrf.mxu0
        %v1808 = vadd.f32 %v1243, %v1807
        %v1809 = vpop.f32.mrf.mxu0
        %v1810 = vpop.f32.mrf.mxu0
        %v1811 = vadd.f32 %v1243, %v1810
        %v1812 = vpop.f32.mrf.mxu0
        %1813 = vmatprep.mubr.bf16.mxu0 %v985
        %1814 = vmatmul.mubr.bf16.gmra.mxu0 %v921
        %v1815 = vpop.f32.mrf.mxu0
        %v1816 = vadd.f32 %v1243, %v1815
        %v1817 = vpop.f32.mrf.mxu0
        %v1818 = vpop.f32.mrf.mxu0
        %v1819 = vadd.f32 %v1243, %v1818
        %v1820 = vpop.f32.mrf.mxu0
        %1821 = vmatprep.mubr.bf16.mxu0 %v986
        %1822 = vmatmul.mubr.bf16.gmra.mxu0 %v922
        %v1823 = vpop.f32.mrf.mxu0
        %v1824 = vadd.f32 %v1243, %v1823
        %v1825 = vpop.f32.mrf.mxu0
        %v1826 = vpop.f32.mrf.mxu0
        %v1827 = vadd.f32 %v1243, %v1826
        %v1828 = vpop.f32.mrf.mxu0
        %1829 = vmatprep.mubr.bf16.mxu0 %v987
        %1830 = vmatmul.mubr.bf16.gmra.mxu0 %v923
        %v1831 = vpop.f32.mrf.mxu0
        %v1832 = vadd.f32 %v1243, %v1831
        %v1833 = vpop.f32.mrf.mxu0
        %v1834 = vpop.f32.mrf.mxu0
        %v1835 = vadd.f32 %v1243, %v1834
        %v1836 = vpop.f32.mrf.mxu0
        %1837 = vdwg.mxu0
        %1838 = vmatprep.subr.bf16.mxu0 0
        %1839 = vmatpush1.bf16.msra.mxu0 %v1556
        %1840 = vmatprep.subr.bf16.mxu0 0
        %1841 = vmatpush1.bf16.msra.mxu0 %v1555
        %1842 = vmatprep.subr.bf16.mxu0 0
        %1843 = vmatpush1.bf16.msra.mxu0 %v1554
        %1844 = vmatprep.subr.bf16.mxu0 0
        %1845 = vmatpush1.bf16.msra.mxu0 %v1553
        %1846 = vmatprep.subr.bf16.mxu0 0
        %1847 = vmatpush1.bf16.msra.mxu0 %v1552
        %1848 = vmatprep.subr.bf16.mxu0 0
        %1849 = vmatpush1.bf16.msra.mxu0 %v1551
        %1850 = vmatprep.subr.bf16.mxu0 0
        %1851 = vmatpush1.bf16.msra.mxu0 %v1550
        %1852 = vmatprep.subr.bf16.mxu0 0
        %1853 = vmatpush1.bf16.msra.mxu0 %v1549
        %1854 = vmatprep.subr.bf16.mxu0 0
        %1855 = vmatpush2.bf16.msra.mxu0 %v1564
        %1856 = vmatprep.subr.bf16.mxu0 0
        %1857 = vmatpush2.bf16.msra.mxu0 %v1563
        %1858 = vmatprep.subr.bf16.mxu0 0
        %1859 = vmatpush2.bf16.msra.mxu0 %v1562
        %1860 = vmatprep.subr.bf16.mxu0 0
        %1861 = vmatpush2.bf16.msra.mxu0 %v1561
        %1862 = vmatprep.subr.bf16.mxu0 0
        %1863 = vmatpush2.bf16.msra.mxu0 %v1560
        %1864 = vmatprep.subr.bf16.mxu0 0
        %1865 = vmatpush2.bf16.msra.mxu0 %v1559
        %1866 = vmatprep.subr.bf16.mxu0 0
        %1867 = vmatpush2.bf16.msra.mxu0 %v1558
        %1868 = vmatprep.subr.bf16.mxu0 0
        %1869 = vmatpush2.bf16.msra.mxu0 %v1557
        %1870 = vmatprep.mubr.bf16.mxu0 %v909
        %1871 = vmatmul.mubr.bf16.gmra.mxu0 %v1036
        %v1872 = vpop.f32.mrf.mxu0
        %v1873 = vadd.f32 %v1712, %v1872
        %v1874 = vpop.f32.mrf.mxu0
        %v1875 = vpop.f32.mrf.mxu0
        %v1876 = vadd.f32 %v1715, %v1875
        %v1877 = vpop.f32.mrf.mxu0
        %1878 = vmatprep.mubr.bf16.mxu0 %v910
        %1879 = vmatmul.mubr.bf16.gmra.mxu0 %v1037
        %v1880 = vpop.f32.mrf.mxu0
        %v1881 = vadd.f32 %v1720, %v1880
        %v1882 = vpop.f32.mrf.mxu0
        %v1883 = vpop.f32.mrf.mxu0
        %v1884 = vadd.f32 %v1723, %v1883
        %v1885 = vpop.f32.mrf.mxu0
        %1886 = vmatprep.mubr.bf16.mxu0 %v911
        %1887 = vmatmul.mubr.bf16.gmra.mxu0 %v1038
        %v1888 = vpop.f32.mrf.mxu0
        %v1889 = vadd.f32 %v1728, %v1888
        %v1890 = vpop.f32.mrf.mxu0
        %v1891 = vpop.f32.mrf.mxu0
        %v1892 = vadd.f32 %v1731, %v1891
        %v1893 = vpop.f32.mrf.mxu0
        %1894 = vmatprep.mubr.bf16.mxu0 %v912
        %1895 = vmatmul.mubr.bf16.gmra.mxu0 %v1039
        %v1896 = vpop.f32.mrf.mxu0
        %v1897 = vadd.f32 %v1736, %v1896
        %v1898 = vpop.f32.mrf.mxu0
        %v1899 = vpop.f32.mrf.mxu0
        %v1900 = vadd.f32 %v1739, %v1899
        %v1901 = vpop.f32.mrf.mxu0
        %1902 = vmatprep.mubr.bf16.mxu0 %v913
        %1903 = vmatmul.mubr.bf16.gmra.mxu0 %v1040
        %v1904 = vpop.f32.mrf.mxu0
        %v1905 = vadd.f32 %v1744, %v1904
        %v1906 = vpop.f32.mrf.mxu0
        %v1907 = vpop.f32.mrf.mxu0
        %v1908 = vadd.f32 %v1747, %v1907
        %v1909 = vpop.f32.mrf.mxu0
        %1910 = vmatprep.mubr.bf16.mxu0 %v914
        %1911 = vmatmul.mubr.bf16.gmra.mxu0 %v1041
        %v1912 = vpop.f32.mrf.mxu0
        %v1913 = vadd.f32 %v1752, %v1912
        %v1914 = vpop.f32.mrf.mxu0
        %v1915 = vpop.f32.mrf.mxu0
        %v1916 = vadd.f32 %v1755, %v1915
        %v1917 = vpop.f32.mrf.mxu0
        %1918 = vmatprep.mubr.bf16.mxu0 %v915
        %1919 = vmatmul.mubr.bf16.gmra.mxu0 %v1042
        %v1920 = vpop.f32.mrf.mxu0
        %v1921 = vadd.f32 %v1760, %v1920
        %v1922 = vpop.f32.mrf.mxu0
        %v1923 = vpop.f32.mrf.mxu0
        %v1924 = vadd.f32 %v1763, %v1923
        %v1925 = vpop.f32.mrf.mxu0
        %1926 = vmatprep.mubr.bf16.mxu0 %v916
        %1927 = vmatmul.mubr.bf16.gmra.mxu0 %v1043
        %v1928 = vpop.f32.mrf.mxu0
        %v1929 = vadd.f32 %v1768, %v1928
        %v1930 = vpop.f32.mrf.mxu0
        %v1931 = vpop.f32.mrf.mxu0
        %v1932 = vadd.f32 %v1771, %v1931
        %v1933 = vpop.f32.mrf.mxu0
        %1934 = vmatprep.mubr.bf16.mxu0 %v917
        %1935 = vmatmul.mubr.bf16.gmra.mxu0 %v1044
        %v1936 = vpop.f32.mrf.mxu0
        %v1937 = vadd.f32 %v1776, %v1936
        %v1938 = vpop.f32.mrf.mxu0
        %v1939 = vpop.f32.mrf.mxu0
        %v1940 = vadd.f32 %v1779, %v1939
        %v1941 = vpop.f32.mrf.mxu0
        %1942 = vmatprep.mubr.bf16.mxu0 %v918
        %1943 = vmatmul.mubr.bf16.gmra.mxu0 %v1045
        %v1944 = vpop.f32.mrf.mxu0
        %v1945 = vadd.f32 %v1784, %v1944
        %v1946 = vpop.f32.mrf.mxu0
        %v1947 = vpop.f32.mrf.mxu0
        %v1948 = vadd.f32 %v1787, %v1947
        %v1949 = vpop.f32.mrf.mxu0
        %1950 = vmatprep.mubr.bf16.mxu0 %v919
        %1951 = vmatmul.mubr.bf16.gmra.mxu0 %v1046
        %v1952 = vpop.f32.mrf.mxu0
        %v1953 = vadd.f32 %v1792, %v1952
        %v1954 = vpop.f32.mrf.mxu0
        %v1955 = vpop.f32.mrf.mxu0
        %v1956 = vadd.f32 %v1795, %v1955
        %v1957 = vpop.f32.mrf.mxu0
        %1958 = vmatprep.mubr.bf16.mxu0 %v920
        %1959 = vmatmul.mubr.bf16.gmra.mxu0 %v1047
        %v1960 = vpop.f32.mrf.mxu0
        %v1961 = vadd.f32 %v1800, %v1960
        %v1962 = vpop.f32.mrf.mxu0
        %v1963 = vpop.f32.mrf.mxu0
        %v1964 = vadd.f32 %v1803, %v1963
        %v1965 = vpop.f32.mrf.mxu0
        %1966 = vmatprep.mubr.bf16.mxu0 %v921
        %1967 = vmatmul.mubr.bf16.gmra.mxu0 %v1048
        %v1968 = vpop.f32.mrf.mxu0
        %v1969 = vadd.f32 %v1808, %v1968
        %v1970 = vpop.f32.mrf.mxu0
        %v1971 = vpop.f32.mrf.mxu0
        %v1972 = vadd.f32 %v1811, %v1971
        %v1973 = vpop.f32.mrf.mxu0
        %1974 = vmatprep.mubr.bf16.mxu0 %v922
        %1975 = vmatmul.mubr.bf16.gmra.mxu0 %v1049
        %v1976 = vpop.f32.mrf.mxu0
        %v1977 = vadd.f32 %v1816, %v1976
        %v1978 = vpop.f32.mrf.mxu0
        %v1979 = vpop.f32.mrf.mxu0
        %v1980 = vadd.f32 %v1819, %v1979
        %v1981 = vpop.f32.mrf.mxu0
        %1982 = vmatprep.mubr.bf16.mxu0 %v923
        %1983 = vmatmul.mubr.bf16.gmra.mxu0 %v1050
        %v1984 = vpop.f32.mrf.mxu0
        %v1985 = vadd.f32 %v1824, %v1984
        %v1986 = vpop.f32.mrf.mxu0
        %v1987 = vpop.f32.mrf.mxu0
        %v1988 = vadd.f32 %v1827, %v1987
        %v1989 = vpop.f32.mrf.mxu0
        %1990 = vmatprep.mubr.bf16.mxu0 %v1071
        %1991 = vmatmul.mubr.bf16.gmra.mxu0 %v1051
        %v1992 = vpop.f32.mrf.mxu0
        %v1993 = vadd.f32 %v1832, %v1992
        %v1994 = vpop.f32.mrf.mxu0
        %v1995 = vpop.f32.mrf.mxu0
        %v1996 = vadd.f32 %v1835, %v1995
        %v1997 = vpop.f32.mrf.mxu0
        %1998 = vdwg.mxu0
        %1999 = vmatprep.subr.bf16.mxu0 0
        %2000 = vmatpush1.bf16.msra.mxu0 %v1572
        %2001 = vmatprep.subr.bf16.mxu0 0
        %2002 = vmatpush1.bf16.msra.mxu0 %v1571
        %2003 = vmatprep.subr.bf16.mxu0 0
        %2004 = vmatpush1.bf16.msra.mxu0 %v1570
        %2005 = vmatprep.subr.bf16.mxu0 0
        %2006 = vmatpush1.bf16.msra.mxu0 %v1569
        %2007 = vmatprep.subr.bf16.mxu0 0
        %2008 = vmatpush1.bf16.msra.mxu0 %v1568
        %2009 = vmatprep.subr.bf16.mxu0 0
        %2010 = vmatpush1.bf16.msra.mxu0 %v1567
        %2011 = vmatprep.subr.bf16.mxu0 0
        %2012 = vmatpush1.bf16.msra.mxu0 %v1566
        %2013 = vmatprep.subr.bf16.mxu0 0
        %2014 = vmatpush1.bf16.msra.mxu0 %v1565
        %2015 = vmatprep.subr.bf16.mxu0 0
        %2016 = vmatpush2.bf16.msra.mxu0 %v1580
        %2017 = vmatprep.subr.bf16.mxu0 0
        %2018 = vmatpush2.bf16.msra.mxu0 %v1579
        %2019 = vmatprep.subr.bf16.mxu0 0
        %2020 = vmatpush2.bf16.msra.mxu0 %v1578
        %2021 = vmatprep.subr.bf16.mxu0 0
        %2022 = vmatpush2.bf16.msra.mxu0 %v1577
        %2023 = vmatprep.subr.bf16.mxu0 0
        %2024 = vmatpush2.bf16.msra.mxu0 %v1576
        %2025 = vmatprep.subr.bf16.mxu0 0
        %2026 = vmatpush2.bf16.msra.mxu0 %v1575
        %2027 = vmatprep.subr.bf16.mxu0 0
        %2028 = vmatpush2.bf16.msra.mxu0 %v1574
        %2029 = vmatprep.subr.bf16.mxu0 0
        %2030 = vmatpush2.bf16.msra.mxu0 %v1573
        %2031 = vmatprep.mubr.bf16.mxu0 %v1037
        %2032 = vmatmul.mubr.bf16.gmra.mxu0 %v973
        %v2033 = vpop.f32.mrf.mxu0
        %v2034 = vadd.f32 %v1873, %v2033
        %v2035 = vpop.f32.mrf.mxu0
        %v2036 = vpop.f32.mrf.mxu0
        %v2037 = vadd.f32 %v1876, %v2036
        %v2038 = vpop.f32.mrf.mxu0
        %2039 = vmatprep.mubr.bf16.mxu0 %v1038
        %2040 = vmatmul.mubr.bf16.gmra.mxu0 %v974
        %v2041 = vpop.f32.mrf.mxu0
        %v2042 = vadd.f32 %v1881, %v2041
        %v2043 = vpop.f32.mrf.mxu0
        %v2044 = vpop.f32.mrf.mxu0
        %v2045 = vadd.f32 %v1884, %v2044
        %v2046 = vpop.f32.mrf.mxu0
        %2047 = vmatprep.mubr.bf16.mxu0 %v1039
        %2048 = vmatmul.mubr.bf16.gmra.mxu0 %v975
        %v2049 = vpop.f32.mrf.mxu0
        %v2050 = vadd.f32 %v1889, %v2049
        %v2051 = vpop.f32.mrf.mxu0
        %v2052 = vpop.f32.mrf.mxu0
        %v2053 = vadd.f32 %v1892, %v2052
        %v2054 = vpop.f32.mrf.mxu0
        %2055 = vmatprep.mubr.bf16.mxu0 %v1040
        %2056 = vmatmul.mubr.bf16.gmra.mxu0 %v976
        %v2057 = vpop.f32.mrf.mxu0
        %v2058 = vadd.f32 %v1897, %v2057
        %v2059 = vpop.f32.mrf.mxu0
        %v2060 = vpop.f32.mrf.mxu0
        %v2061 = vadd.f32 %v1900, %v2060
        %v2062 = vpop.f32.mrf.mxu0
        %2063 = vmatprep.mubr.bf16.mxu0 %v1041
        %2064 = vmatmul.mubr.bf16.gmra.mxu0 %v977
        %v2065 = vpop.f32.mrf.mxu0
        %v2066 = vadd.f32 %v1905, %v2065
        %v2067 = vpop.f32.mrf.mxu0
        %v2068 = vpop.f32.mrf.mxu0
        %v2069 = vadd.f32 %v1908, %v2068
        %v2070 = vpop.f32.mrf.mxu0
        %2071 = vmatprep.mubr.bf16.mxu0 %v1042
        %2072 = vmatmul.mubr.bf16.gmra.mxu0 %v978
        %v2073 = vpop.f32.mrf.mxu0
        %v2074 = vadd.f32 %v1913, %v2073
        %v2075 = vpop.f32.mrf.mxu0
        %v2076 = vpop.f32.mrf.mxu0
        %v2077 = vadd.f32 %v1916, %v2076
        %v2078 = vpop.f32.mrf.mxu0
        %2079 = vmatprep.mubr.bf16.mxu0 %v1043
        %2080 = vmatmul.mubr.bf16.gmra.mxu0 %v979
        %v2081 = vpop.f32.mrf.mxu0
        %v2082 = vadd.f32 %v1921, %v2081
        %v2083 = vpop.f32.mrf.mxu0
        %v2084 = vpop.f32.mrf.mxu0
        %v2085 = vadd.f32 %v1924, %v2084
        %v2086 = vpop.f32.mrf.mxu0
        %2087 = vmatprep.mubr.bf16.mxu0 %v1044
        %2088 = vmatmul.mubr.bf16.gmra.mxu0 %v980
        %v2089 = vpop.f32.mrf.mxu0
        %v2090 = vadd.f32 %v1929, %v2089
        %v2091 = vpop.f32.mrf.mxu0
        %v2092 = vpop.f32.mrf.mxu0
        %v2093 = vadd.f32 %v1932, %v2092
        %v2094 = vpop.f32.mrf.mxu0
        %2095 = vmatprep.mubr.bf16.mxu0 %v1045
        %2096 = vmatmul.mubr.bf16.gmra.mxu0 %v981
        %v2097 = vpop.f32.mrf.mxu0
        %v2098 = vadd.f32 %v1937, %v2097
        %v2099 = vpop.f32.mrf.mxu0
        %v2100 = vpop.f32.mrf.mxu0
        %v2101 = vadd.f32 %v1940, %v2100
        %v2102 = vpop.f32.mrf.mxu0
        %2103 = vmatprep.mubr.bf16.mxu0 %v1046
        %2104 = vmatmul.mubr.bf16.gmra.mxu0 %v982
        %v2105 = vpop.f32.mrf.mxu0
        %v2106 = vadd.f32 %v1945, %v2105
        %v2107 = vpop.f32.mrf.mxu0
        %v2108 = vpop.f32.mrf.mxu0
        %v2109 = vadd.f32 %v1948, %v2108
        %v2110 = vpop.f32.mrf.mxu0
        %2111 = vmatprep.mubr.bf16.mxu0 %v1047
        %2112 = vmatmul.mubr.bf16.gmra.mxu0 %v983
        %v2113 = vpop.f32.mrf.mxu0
        %v2114 = vadd.f32 %v1953, %v2113
        %v2115 = vpop.f32.mrf.mxu0
        %v2116 = vpop.f32.mrf.mxu0
        %v2117 = vadd.f32 %v1956, %v2116
        %v2118 = vpop.f32.mrf.mxu0
        %2119 = vmatprep.mubr.bf16.mxu0 %v1048
        %2120 = vmatmul.mubr.bf16.gmra.mxu0 %v984
        %v2121 = vpop.f32.mrf.mxu0
        %v2122 = vadd.f32 %v1961, %v2121
        %v2123 = vpop.f32.mrf.mxu0
        %v2124 = vpop.f32.mrf.mxu0
        %v2125 = vadd.f32 %v1964, %v2124
        %v2126 = vpop.f32.mrf.mxu0
        %2127 = vmatprep.mubr.bf16.mxu0 %v1049
        %2128 = vmatmul.mubr.bf16.gmra.mxu0 %v985
        %v2129 = vpop.f32.mrf.mxu0
        %v2130 = vadd.f32 %v1969, %v2129
        %v2131 = vpop.f32.mrf.mxu0
        %v2132 = vpop.f32.mrf.mxu0
        %v2133 = vadd.f32 %v1972, %v2132
        %v2134 = vpop.f32.mrf.mxu0
        %2135 = vmatprep.mubr.bf16.mxu0 %v1050
        %2136 = vmatmul.mubr.bf16.gmra.mxu0 %v986
        %v2137 = vpop.f32.mrf.mxu0
        %v2138 = vadd.f32 %v1977, %v2137
        %v2139 = vpop.f32.mrf.mxu0
        %v2140 = vpop.f32.mrf.mxu0
        %v2141 = vadd.f32 %v1980, %v2140
        %v2142 = vpop.f32.mrf.mxu0
        %2143 = vmatprep.mubr.bf16.mxu0 %v1051
        %2144 = vmatmul.mubr.bf16.gmra.mxu0 %v987
        %v2145 = vpop.f32.mrf.mxu0
        %v2146 = vadd.f32 %v1985, %v2145
        %v2147 = vpop.f32.mrf.mxu0
        %v2148 = vpop.f32.mrf.mxu0
        %v2149 = vadd.f32 %v1988, %v2148
        %v2150 = vpop.f32.mrf.mxu0
        %2151 = vmatprep.mubr.bf16.mxu0 %v1079
        %2152 = vmatmul.mubr.bf16.gmra.mxu0 %v1075
        %v2153 = vpop.f32.mrf.mxu0
        %v2154 = vadd.f32 %v1993, %v2153
        %v2155 = vpop.f32.mrf.mxu0
        %v2156 = vpop.f32.mrf.mxu0
        %v2157 = vadd.f32 %v1996, %v2156
        %v2158 = vpop.f32.mrf.mxu0
        %2159 = vdwg.mxu0
        %2160 = vmatprep.subr.bf16.mxu0 0
        %2161 = vmatpush1.bf16.msra.mxu0 %v1588
        %2162 = vmatprep.subr.bf16.mxu0 0
        %2163 = vmatpush1.bf16.msra.mxu0 %v1587
        %2164 = vmatprep.subr.bf16.mxu0 0
        %2165 = vmatpush1.bf16.msra.mxu0 %v1586
        %2166 = vmatprep.subr.bf16.mxu0 0
        %2167 = vmatpush1.bf16.msra.mxu0 %v1585
        %2168 = vmatprep.subr.bf16.mxu0 0
        %2169 = vmatpush1.bf16.msra.mxu0 %v1584
        %2170 = vmatprep.subr.bf16.mxu0 0
        %2171 = vmatpush1.bf16.msra.mxu0 %v1583
        %2172 = vmatprep.subr.bf16.mxu0 0
        %2173 = vmatpush1.bf16.msra.mxu0 %v1582
        %2174 = vmatprep.subr.bf16.mxu0 0
        %2175 = vmatpush1.bf16.msra.mxu0 %v1581
        %2176 = vmatprep.subr.bf16.mxu0 0
        %2177 = vmatpush2.bf16.msra.mxu0 %v1596
        %2178 = vmatprep.subr.bf16.mxu0 0
        %2179 = vmatpush2.bf16.msra.mxu0 %v1595
        %2180 = vmatprep.subr.bf16.mxu0 0
        %2181 = vmatpush2.bf16.msra.mxu0 %v1594
        %2182 = vmatprep.subr.bf16.mxu0 0
        %2183 = vmatpush2.bf16.msra.mxu0 %v1593
        %2184 = vmatprep.subr.bf16.mxu0 0
        %2185 = vmatpush2.bf16.msra.mxu0 %v1592
        %2186 = vmatprep.subr.bf16.mxu0 0
        %2187 = vmatpush2.bf16.msra.mxu0 %v1591
        %2188 = vmatprep.subr.bf16.mxu0 0
        %2189 = vmatpush2.bf16.msra.mxu0 %v1590
        %2190 = vmatprep.subr.bf16.mxu0 0
        %2191 = vmatpush2.bf16.msra.mxu0 %v1589
        %2192 = vmatprep.mubr.bf16.mxu0 %v974
        %2193 = vmatmul.mubr.bf16.gmra.mxu0 %v910
        %v2194 = vpop.f32.mrf.mxu0
        %v2195 = vadd.f32 %v2034, %v2194
        %v2196 = vpop.f32.mrf.mxu0
        %v2197 = vpop.f32.mrf.mxu0
        %v2198 = vadd.f32 %v2037, %v2197
        %v2199 = vpop.f32.mrf.mxu0
        %2200 = vmatprep.mubr.bf16.mxu0 %v975
        %2201 = vmatmul.mubr.bf16.gmra.mxu0 %v911
        %v2202 = vpop.f32.mrf.mxu0
        %v2203 = vadd.f32 %v2042, %v2202
        %v2204 = vpop.f32.mrf.mxu0
        %v2205 = vpop.f32.mrf.mxu0
        %v2206 = vadd.f32 %v2045, %v2205
        %v2207 = vpop.f32.mrf.mxu0
        %2208 = vmatprep.mubr.bf16.mxu0 %v976
        %2209 = vmatmul.mubr.bf16.gmra.mxu0 %v912
        %v2210 = vpop.f32.mrf.mxu0
        %v2211 = vadd.f32 %v2050, %v2210
        %v2212 = vpop.f32.mrf.mxu0
        %v2213 = vpop.f32.mrf.mxu0
        %v2214 = vadd.f32 %v2053, %v2213
        %v2215 = vpop.f32.mrf.mxu0
        %2216 = vmatprep.mubr.bf16.mxu0 %v977
        %2217 = vmatmul.mubr.bf16.gmra.mxu0 %v913
        %v2218 = vpop.f32.mrf.mxu0
        %v2219 = vadd.f32 %v2058, %v2218
        %v2220 = vpop.f32.mrf.mxu0
        %v2221 = vpop.f32.mrf.mxu0
        %v2222 = vadd.f32 %v2061, %v2221
        %v2223 = vpop.f32.mrf.mxu0
        %2224 = vmatprep.mubr.bf16.mxu0 %v978
        %2225 = vmatmul.mubr.bf16.gmra.mxu0 %v914
        %v2226 = vpop.f32.mrf.mxu0
        %v2227 = vadd.f32 %v2066, %v2226
        %v2228 = vpop.f32.mrf.mxu0
        %v2229 = vpop.f32.mrf.mxu0
        %v2230 = vadd.f32 %v2069, %v2229
        %v2231 = vpop.f32.mrf.mxu0
        %2232 = vmatprep.mubr.bf16.mxu0 %v979
        %2233 = vmatmul.mubr.bf16.gmra.mxu0 %v915
        %v2234 = vpop.f32.mrf.mxu0
        %v2235 = vadd.f32 %v2074, %v2234
        %v2236 = vpop.f32.mrf.mxu0
        %v2237 = vpop.f32.mrf.mxu0
        %v2238 = vadd.f32 %v2077, %v2237
        %v2239 = vpop.f32.mrf.mxu0
        %2240 = vmatprep.mubr.bf16.mxu0 %v980
        %2241 = vmatmul.mubr.bf16.gmra.mxu0 %v916
        %v2242 = vpop.f32.mrf.mxu0
        %v2243 = vadd.f32 %v2082, %v2242
        %v2244 = vpop.f32.mrf.mxu0
        %v2245 = vpop.f32.mrf.mxu0
        %v2246 = vadd.f32 %v2085, %v2245
        %v2247 = vpop.f32.mrf.mxu0
        %2248 = vmatprep.mubr.bf16.mxu0 %v981
        %2249 = vmatmul.mubr.bf16.gmra.mxu0 %v917
        %v2250 = vpop.f32.mrf.mxu0
        %v2251 = vadd.f32 %v2090, %v2250
        %v2252 = vpop.f32.mrf.mxu0
        %v2253 = vpop.f32.mrf.mxu0
        %v2254 = vadd.f32 %v2093, %v2253
        %v2255 = vpop.f32.mrf.mxu0
        %2256 = vmatprep.mubr.bf16.mxu0 %v982
        %2257 = vmatmul.mubr.bf16.gmra.mxu0 %v918
        %v2258 = vpop.f32.mrf.mxu0
        %v2259 = vadd.f32 %v2098, %v2258
        %v2260 = vpop.f32.mrf.mxu0
        %v2261 = vpop.f32.mrf.mxu0
        %v2262 = vadd.f32 %v2101, %v2261
        %v2263 = vpop.f32.mrf.mxu0
        %2264 = vmatprep.mubr.bf16.mxu0 %v983
        %2265 = vmatmul.mubr.bf16.gmra.mxu0 %v919
        %v2266 = vpop.f32.mrf.mxu0
        %v2267 = vadd.f32 %v2106, %v2266
        %v2268 = vpop.f32.mrf.mxu0
        %v2269 = vpop.f32.mrf.mxu0
        %v2270 = vadd.f32 %v2109, %v2269
        %v2271 = vpop.f32.mrf.mxu0
        %2272 = vmatprep.mubr.bf16.mxu0 %v984
        %2273 = vmatmul.mubr.bf16.gmra.mxu0 %v920
        %v2274 = vpop.f32.mrf.mxu0
        %v2275 = vadd.f32 %v2114, %v2274
        %v2276 = vpop.f32.mrf.mxu0
        %v2277 = vpop.f32.mrf.mxu0
        %v2278 = vadd.f32 %v2117, %v2277
        %v2279 = vpop.f32.mrf.mxu0
        %2280 = vmatprep.mubr.bf16.mxu0 %v985
        %2281 = vmatmul.mubr.bf16.gmra.mxu0 %v921
        %v2282 = vpop.f32.mrf.mxu0
        %v2283 = vadd.f32 %v2122, %v2282
        %v2284 = vpop.f32.mrf.mxu0
        %v2285 = vpop.f32.mrf.mxu0
        %v2286 = vadd.f32 %v2125, %v2285
        %v2287 = vpop.f32.mrf.mxu0
        %2288 = vmatprep.mubr.bf16.mxu0 %v986
        %2289 = vmatmul.mubr.bf16.gmra.mxu0 %v922
        %v2290 = vpop.f32.mrf.mxu0
        %v2291 = vadd.f32 %v2130, %v2290
        %v2292 = vpop.f32.mrf.mxu0
        %v2293 = vpop.f32.mrf.mxu0
        %v2294 = vadd.f32 %v2133, %v2293
        %v2295 = vpop.f32.mrf.mxu0
        %2296 = vmatprep.mubr.bf16.mxu0 %v987
        %2297 = vmatmul.mubr.bf16.gmra.mxu0 %v923
        %v2298 = vpop.f32.mrf.mxu0
        %v2299 = vadd.f32 %v2138, %v2298
        %v2300 = vpop.f32.mrf.mxu0
        %v2301 = vpop.f32.mrf.mxu0
        %v2302 = vadd.f32 %v2141, %v2301
        %v2303 = vpop.f32.mrf.mxu0
        %2304 = vmatprep.mubr.bf16.mxu0 %v1075
        %2305 = vmatmul.mubr.bf16.gmra.mxu0 %v1071
        %v2306 = vpop.f32.mrf.mxu0
        %v2307 = vadd.f32 %v2146, %v2306
        %v2308 = vpop.f32.mrf.mxu0
        %v2309 = vpop.f32.mrf.mxu0
        %v2310 = vadd.f32 %v2149, %v2309
        %v2311 = vpop.f32.mrf.mxu0
        %2312 = vmatprep.mubr.bf16.mxu0 %v1088
        %2313 = vmatmul.mubr.bf16.gmra.mxu0 %v1084
        %v2314 = vpop.f32.mrf.mxu0
        %v2315 = vadd.f32 %v2154, %v2314
        %v2316 = vpop.f32.mrf.mxu0
        %v2317 = vpop.f32.mrf.mxu0
        %v2318 = vadd.f32 %v2157, %v2317
        %v2319 = vpop.f32.mrf.mxu0
        %2320 = vdwg.mxu0
        %2321 = vmatprep.subr.bf16.mxu0 0
        %2322 = vmatpush1.bf16.msra.mxu0 %v1604
        %2323 = vmatprep.subr.bf16.mxu0 0
        %2324 = vmatpush1.bf16.msra.mxu0 %v1603
        %2325 = vmatprep.subr.bf16.mxu0 0
        %2326 = vmatpush1.bf16.msra.mxu0 %v1602
        %2327 = vmatprep.subr.bf16.mxu0 0
        %2328 = vmatpush1.bf16.msra.mxu0 %v1601
        %2329 = vmatprep.subr.bf16.mxu0 0
        %2330 = vmatpush1.bf16.msra.mxu0 %v1600
        %2331 = vmatprep.subr.bf16.mxu0 0
        %2332 = vmatpush1.bf16.msra.mxu0 %v1599
        %2333 = vmatprep.subr.bf16.mxu0 0
        %2334 = vmatpush1.bf16.msra.mxu0 %v1598
        %2335 = vmatprep.subr.bf16.mxu0 0
        %2336 = vmatpush1.bf16.msra.mxu0 %v1597
        %2337 = vmatprep.subr.bf16.mxu0 0
        %2338 = vmatpush2.bf16.msra.mxu0 0
        %2339 = vmatprep.subr.bf16.mxu0 0
        %2340 = vmatpush2.bf16.msra.mxu0 0
        %2341 = vmatprep.subr.bf16.mxu0 0
        %2342 = vmatpush2.bf16.msra.mxu0 0
        %2343 = vmatprep.subr.bf16.mxu0 0
        %2344 = vmatpush2.bf16.msra.mxu0 0
        %2345 = vmatprep.subr.bf16.mxu0 0
        %2346 = vmatpush2.bf16.msra.mxu0 0
        %2347 = vmatprep.subr.bf16.mxu0 0
        %2348 = vmatpush2.bf16.msra.mxu0 0
        %2349 = vmatprep.subr.bf16.mxu0 0
        %2350 = vmatpush2.bf16.msra.mxu0 0
        %2351 = vmatprep.subr.bf16.mxu0 0
        %2352 = vmatpush2.bf16.msra.mxu0 0
        %2353 = vmatprep.mubr.bf16.mxu0 0
        %2354 = vmatmul.mubr.bf16.gmra.mxu0 %v1038
        %v2355 = vpop.f32.mrf.mxu0
        %v2356 = vadd.f32 %v2195, %v2355
        %v2357 = vpop.f32.mrf.mxu0
        %v2358 = vpop.f32.mrf.mxu0
        %v2359 = vadd.f32 %v2198, %v2358
        %v2360 = vpop.f32.mrf.mxu0
        %2361 = vmatprep.mubr.bf16.mxu0 0
        %2362 = vmatmul.mubr.bf16.gmra.mxu0 %v1039
        %v2363 = vpop.f32.mrf.mxu0
        %v2364 = vadd.f32 %v2203, %v2363
        %v2365 = vpop.f32.mrf.mxu0
        %v2366 = vpop.f32.mrf.mxu0
        %v2367 = vadd.f32 %v2206, %v2366
        %v2368 = vpop.f32.mrf.mxu0
        %2369 = vmatprep.mubr.bf16.mxu0 0
        %2370 = vmatmul.mubr.bf16.gmra.mxu0 %v1040
        %v2371 = vpop.f32.mrf.mxu0
        %v2372 = vadd.f32 %v2211, %v2371
        %v2373 = vpop.f32.mrf.mxu0
        %v2374 = vpop.f32.mrf.mxu0
        %v2375 = vadd.f32 %v2214, %v2374
        %v2376 = vpop.f32.mrf.mxu0
        %2377 = vmatprep.mubr.bf16.mxu0 0
        %2378 = vmatmul.mubr.bf16.gmra.mxu0 %v1041
        %v2379 = vpop.f32.mrf.mxu0
        %v2380 = vadd.f32 %v2219, %v2379
        %v2381 = vpop.f32.mrf.mxu0
        %v2382 = vpop.f32.mrf.mxu0
        %v2383 = vadd.f32 %v2222, %v2382
        %v2384 = vpop.f32.mrf.mxu0
        %2385 = vmatprep.mubr.bf16.mxu0 0
        %2386 = vmatmul.mubr.bf16.gmra.mxu0 %v1042
        %v2387 = vpop.f32.mrf.mxu0
        %v2388 = vadd.f32 %v2227, %v2387
        %v2389 = vpop.f32.mrf.mxu0
        %v2390 = vpop.f32.mrf.mxu0
        %v2391 = vadd.f32 %v2230, %v2390
        %v2392 = vpop.f32.mrf.mxu0
        %2393 = vmatprep.mubr.bf16.mxu0 0
        %2394 = vmatmul.mubr.bf16.gmra.mxu0 %v1043
        %v2395 = vpop.f32.mrf.mxu0
        %v2396 = vadd.f32 %v2235, %v2395
        %v2397 = vpop.f32.mrf.mxu0
        %v2398 = vpop.f32.mrf.mxu0
        %v2399 = vadd.f32 %v2238, %v2398
        %v2400 = vpop.f32.mrf.mxu0
        %2401 = vmatprep.mubr.bf16.mxu0 0
        %2402 = vmatmul.mubr.bf16.gmra.mxu0 %v1044
        %v2403 = vpop.f32.mrf.mxu0
        %v2404 = vadd.f32 %v2243, %v2403
        %v2405 = vpop.f32.mrf.mxu0
        %v2406 = vpop.f32.mrf.mxu0
        %v2407 = vadd.f32 %v2246, %v2406
        %v2408 = vpop.f32.mrf.mxu0
        %2409 = vmatprep.mubr.bf16.mxu0 0
        %2410 = vmatmul.mubr.bf16.gmra.mxu0 %v1045
        %v2411 = vpop.f32.mrf.mxu0
        %v2412 = vadd.f32 %v2251, %v2411
        %v2413 = vpop.f32.mrf.mxu0
        %v2414 = vpop.f32.mrf.mxu0
        %v2415 = vadd.f32 %v2254, %v2414
        %v2416 = vpop.f32.mrf.mxu0
        %2417 = vmatprep.mubr.bf16.mxu0 0
        %2418 = vmatmul.mubr.bf16.gmra.mxu0 %v1046
        %v2419 = vpop.f32.mrf.mxu0
        %v2420 = vadd.f32 %v2259, %v2419
        %v2421 = vpop.f32.mrf.mxu0
        %v2422 = vpop.f32.mrf.mxu0
        %v2423 = vadd.f32 %v2262, %v2422
        %v2424 = vpop.f32.mrf.mxu0
        %2425 = vmatprep.mubr.bf16.mxu0 0
        %2426 = vmatmul.mubr.bf16.gmra.mxu0 %v1047
        %v2427 = vpop.f32.mrf.mxu0
        %v2428 = vadd.f32 %v2267, %v2427
        %v2429 = vpop.f32.mrf.mxu0
        %v2430 = vpop.f32.mrf.mxu0
        %v2431 = vadd.f32 %v2270, %v2430
        %v2432 = vpop.f32.mrf.mxu0
        %2433 = vmatprep.mubr.bf16.mxu0 0
        %2434 = vmatmul.mubr.bf16.gmra.mxu0 %v1048
        %v2435 = vpop.f32.mrf.mxu0
        %v2436 = vadd.f32 %v2275, %v2435
        %v2437 = vpop.f32.mrf.mxu0
        %v2438 = vpop.f32.mrf.mxu0
        %v2439 = vadd.f32 %v2278, %v2438
        %v2440 = vpop.f32.mrf.mxu0
        %2441 = vmatprep.mubr.bf16.mxu0 0
        %2442 = vmatmul.mubr.bf16.gmra.mxu0 %v1049
        %v2443 = vpop.f32.mrf.mxu0
        %v2444 = vadd.f32 %v2283, %v2443
        %v2445 = vpop.f32.mrf.mxu0
        %v2446 = vpop.f32.mrf.mxu0
        %v2447 = vadd.f32 %v2286, %v2446
        %v2448 = vpop.f32.mrf.mxu0
        %2449 = vmatprep.mubr.bf16.mxu0 0
        %2450 = vmatmul.mubr.bf16.gmra.mxu0 %v1050
        %v2451 = vpop.f32.mrf.mxu0
        %v2452 = vadd.f32 %v2291, %v2451
        %v2453 = vpop.f32.mrf.mxu0
        %v2454 = vpop.f32.mrf.mxu0
        %v2455 = vadd.f32 %v2294, %v2454
        %v2456 = vpop.f32.mrf.mxu0
        %2457 = vmatprep.mubr.bf16.mxu0 0
        %2458 = vmatmul.mubr.bf16.gmra.mxu0 %v1051
        %v2459 = vpop.f32.mrf.mxu0
        %v2460 = vadd.f32 %v2299, %v2459
        %v2461 = vpop.f32.mrf.mxu0
        %v2462 = vpop.f32.mrf.mxu0
        %v2463 = vadd.f32 %v2302, %v2462
        %v2464 = vpop.f32.mrf.mxu0
        %2465 = vmatprep.mubr.bf16.mxu0 0
        %2466 = vmatmul.mubr.bf16.gmra.mxu0 %v1079
        %v2467 = vpop.f32.mrf.mxu0
        %v2468 = vadd.f32 %v2307, %v2467
        %v2469 = vpop.f32.mrf.mxu0
        %v2470 = vpop.f32.mrf.mxu0
        %v2471 = vadd.f32 %v2310, %v2470
        %v2472 = vpop.f32.mrf.mxu0
        %2473 = vmatprep.mubr.bf16.mxu0 0
        %2474 = vmatmul.mubr.bf16.gmra.mxu0 %v1092
        %v2475 = vpop.f32.mrf.mxu0
        %v2476 = vadd.f32 %v2315, %v2475
        %v2477 = vpop.f32.mrf.mxu0
        %v2478 = vpop.f32.mrf.mxu0
        %v2479 = vadd.f32 %v2318, %v2478
        %v2480 = vpop.f32.mrf.mxu0
        %2481 = vdwg.mxu0
        %v2482 = vpack.c.bf16 %v2359, %v2356
        %v2483 = vpack.c.bf16 %v2367, %v2364
        %v2484 = vpack.c.bf16 %v2375, %v2372
        %v2485 = vpack.c.bf16 %v2383, %v2380
        %v2486 = vpack.c.bf16 %v2391, %v2388
        %v2487 = vpack.c.bf16 %v2399, %v2396
        %v2488 = vpack.c.bf16 %v2407, %v2404
        %v2489 = vpack.c.bf16 %v2415, %v2412
        %v2490 = vpack.c.bf16 %v2423, %v2420
        %v2491 = vpack.c.bf16 %v2431, %v2428
        %v2492 = vpack.c.bf16 %v2439, %v2436
        %v2493 = vpack.c.bf16 %v2447, %v2444
        %v2494 = vpack.c.bf16 %v2455, %v2452
        %v2495 = vpack.c.bf16 %v2463, %v2460
        %v2496 = vpack.c.bf16 %v2471, %v2468
        %v2497 = vpack.c.bf16 %v2479, %v2476
        %v2514 = vunpack.c.l.b16 %v2482
        %v2515 = vunpack.c.h.b16 %v2482
        %v2516 = vunpack.c.l.b16 %v2483
        %v2517 = vunpack.c.h.b16 %v2483
        %v2518 = vunpack.c.l.b16 %v2484
        %v2519 = vunpack.c.h.b16 %v2484
        %v2520 = vunpack.c.l.b16 %v2485
        %v2521 = vunpack.c.h.b16 %v2485
        %v2522 = vunpack.c.l.b16 %v2486
        %v2523 = vunpack.c.h.b16 %v2486
        %v2524 = vunpack.c.l.b16 %v2487
        %v2525 = vunpack.c.h.b16 %v2487
        %v2526 = vunpack.c.l.b16 %v2488
        %v2527 = vunpack.c.h.b16 %v2488
        %v2528 = vunpack.c.l.b16 %v2489
        %v2529 = vunpack.c.h.b16 %v2489
        %v2530 = vunpack.c.l.b16 %v2490
        %v2531 = vunpack.c.h.b16 %v2490
        %v2532 = vunpack.c.l.b16 %v2491
        %v2533 = vunpack.c.h.b16 %v2491
        %v2534 = vunpack.c.l.b16 %v2492
        %v2535 = vunpack.c.h.b16 %v2492
        %v2536 = vunpack.c.l.b16 %v2493
        %v2537 = vunpack.c.h.b16 %v2493
        %v2538 = vunpack.c.l.b16 %v2494
        %v2539 = vunpack.c.h.b16 %v2494
        %v2540 = vunpack.c.l.b16 %v2495
        %v2541 = vunpack.c.h.b16 %v2495
        %v2542 = vunpack.c.l.b16 %v2496
        %v2543 = vunpack.c.h.b16 %v2496
        %v2544 = vunpack.c.l.b16 %v2497
        %v2545 = vunpack.c.h.b16 %v2497
        %v2546 = vpack.c.b16 %v2514, %v2514
        %v2547 = vpack.c.b16 %v2515, %v2515
        %v2548 = vpack.c.b16 %v2516, %v2516
        %v2549 = vpack.c.b16 %v2517, %v2517
        %v2550 = vpack.c.b16 %v2518, %v2518
        %v2551 = vpack.c.b16 %v2519, %v2519
        %v2552 = vpack.c.b16 %v2520, %v2520
        %v2553 = vpack.c.b16 %v2521, %v2521
        %v2554 = vpack.c.b16 %v2522, %v2522
        %v2555 = vpack.c.b16 %v2523, %v2523
        %v2556 = vpack.c.b16 %v2524, %v2524
        %v2557 = vpack.c.b16 %v2525, %v2525
        %v2558 = vpack.c.b16 %v2526, %v2526
        %v2559 = vpack.c.b16 %v2527, %v2527
        %v2560 = vpack.c.b16 %v2528, %v2528
        %v2561 = vpack.c.b16 %v2529, %v2529
        %v2562 = vpack.c.b16 %v2530, %v2530
        %v2563 = vpack.c.b16 %v2531, %v2531
        %v2564 = vpack.c.b16 %v2532, %v2532
        %v2565 = vpack.c.b16 %v2533, %v2533
        %v2566 = vpack.c.b16 %v2534, %v2534
        %v2567 = vpack.c.b16 %v2535, %v2535
        %v2568 = vpack.c.b16 %v2536, %v2536
        %v2569 = vpack.c.b16 %v2537, %v2537
        %v2570 = vpack.c.b16 %v2538, %v2538
        %v2571 = vpack.c.b16 %v2539, %v2539
        %v2572 = vpack.c.b16 %v2540, %v2540
        %v2573 = vpack.c.b16 %v2541, %v2541
        %v2574 = vpack.c.b16 %v2542, %v2542
        %v2575 = vpack.c.b16 %v2543, %v2543
        %v2576 = vpack.c.b16 %v2544, %v2544
        %v2577 = vpack.c.b16 %v2545, %v2545
        %2610 = vst [vmem:[%s163] sm:$0xf] %v2546
        %2611 = vst [vmem:[%s163 + $0x4] sm:$0xf] %v2547
        %2612 = vst [vmem:[%s163 + $0x8] sm:$0xf] %v2548
        %2613 = vst [vmem:[%s163 + $0xc] sm:$0xf] %v2549
        %2614 = vst [vmem:[%s163 + $0x10] sm:$0xf] %v2550
        %2615 = vst [vmem:[%s163 + $0x14] sm:$0xf] %v2551
        %2616 = vst [vmem:[%s163 + $0x18] sm:$0xf] %v2552
        %2617 = vst [vmem:[%s163 + $0x1c] sm:$0xf] %v2553
        %2618 = vst [vmem:[%s163 + $0x20] sm:$0xf] %v2554
        %2619 = vst [vmem:[%s163 + $0x24] sm:$0xf] %v2555
        %2620 = vst [vmem:[%s163 + $0x28] sm:$0xf] %v2556
        %2621 = vst [vmem:[%s163 + $0x2c] sm:$0xf] %v2557
        %2622 = vst [vmem:[%s163 + $0x30] sm:$0xf] %v2558
        %2623 = vst [vmem:[%s163 + $0x34] sm:$0xf] %v2559
        %2624 = vst [vmem:[%s163 + $0x38] sm:$0xf] %v2560
        %2625 = vst [vmem:[%s163 + $0x3c] sm:$0xf] %v2561
        %2626 = vst [vmem:[%s163 + $0x40] sm:$0xf] %v2562
        %2627 = vst [vmem:[%s163 + $0x44] sm:$0xf] %v2563
        %2628 = vst [vmem:[%s163 + $0x48] sm:$0xf] %v2564
        %2629 = vst [vmem:[%s163 + $0x4c] sm:$0xf] %v2565
        %2630 = vst [vmem:[%s163 + $0x50] sm:$0xf] %v2566
        %2631 = vst [vmem:[%s163 + $0x54] sm:$0xf] %v2567
        %2632 = vst [vmem:[%s163 + $0x58] sm:$0xf] %v2568
        %2633 = vst [vmem:[%s163 + $0x5c] sm:$0xf] %v2569
        %2634 = vst [vmem:[%s163 + $0x60] sm:$0xf] %v2570
        %2635 = vst [vmem:[%s163 + $0x64] sm:$0xf] %v2571
        %2636 = vst [vmem:[%s163 + $0x68] sm:$0xf] %v2572
        %2637 = vst [vmem:[%s163 + $0x6c] sm:$0xf] %v2573
        %2638 = vst [vmem:[%s163 + $0x70] sm:$0xf] %v2574
        %2639 = vst [vmem:[%s163 + $0x74] sm:$0xf] %v2575
        %2640 = vst [vmem:[%s163 + $0x78] sm:$0xf] %v2576
        %2641 = vst [vmem:[%s163 + $0x7c] sm:$0xf] %v2577
        %s2642 = sand.u32 %s93, 1
        %s2643 = scalar_lea.sflag [#allocation3], %s2642
        %s2644 = sand.u32 %s93, 1
        %s2645 = smul.addr %s2644, 128
        %s2646 = scalar_lea.vmem [#allocation2], %s2645
        // Predicated region
        $region33: #{tpu_custom_call.1} parent=31 // pred_check
          %p2647 = pneg %p103
        $region34: #{tpu_custom_call.1} parent=31 // pred_check_branch
          %2649 = sbr.rel (%p2647) target = $region36
        $region35: #{tpu_custom_call.1} parent=31 // pred_region
          %s2651 = ssub.s32 2048, 2048
          %2652 = vsyncadd %s2643, %s2651
          %s2653 = smul.addr %s17, 32
          %s2654 = smul.addr %s2653, 64
          %s2655 = scalar_lea.hbm %s3, %s2654
          %s2656 = sshll.u32 %s2646, 4
          %s2657 = int_to_ptr.vmem [resolvable:$true] %s2656
          %2662 = dma.vmem_to_hbm [thread:$0]  %s2657, 2048, %s2655, %s2643, 64, 64, 4
        $region36: #{tpu_custom_call.1} parent=31 // pred_fallthru
          _
      $region32: #{tpu_custom_call.1} parent=5 // pred_fallthru
        _
      %p2663 = scmp.le.s32.totalorder 2, %s12
      // Predicated region
      $region37: #{tpu_custom_call.1} parent=5 // pred_check
        %p2664 = pneg %p2663
      $region38: #{tpu_custom_call.1} parent=5 // pred_check_branch
        %2666 = sbr.rel (%p2664) target = $region40
      $region39: #{tpu_custom_call.1} parent=5 // pred_region
        %s2667 = ssub.s32 %s12, 2
        // Predicated region
        $region41: #{tpu_custom_call.1} parent=39 // pred_check
          %p2668 = pneg %p109
        $region42: #{tpu_custom_call.1} parent=39 // pred_check_branch
          %2670 = sbr.rel (%p2668) target = $region44
        $region43: #{tpu_custom_call.1} parent=39 // pred_region
          %s2671 = sand.u32 %s94, 1
          %s2672 = scalar_lea.sflag [#allocation3], %s2671
          %s2673 = sand.u32 %s94, 1
          %s2674 = smul.addr %s2673, 128
          %s2675 = scalar_lea.vmem [#allocation2], %s2674
          %2676 = dma.done %s2672, 2048
        $region44: #{tpu_custom_call.1} parent=39 // pred_fallthru
          _
      $region40: #{tpu_custom_call.1} parent=5 // pred_fallthru
        _
    $region6: #{tpu_custom_call.1} parent=1 // loop_footer
      %s16 = sadd.s32 1, %s12
    $region7: #{tpu_custom_call.1} parent=1 // loop_footer_branch
      %11 = sbr.rel target = $region3
    $region8: #{tpu_custom_call.1} parent=1 // loop_exit
      _
    %2677 = vsyncpa [#allocation3], 1
    %s2678 = scalar_lea.sflag [#allocation3], 1
    %2679 = vsyncpa %s2678, 1

</llo_original>
